<compile_context>
chip_gen: v7x
topology: tpu7x:2x2x1
jax: 0.10.0
libtpu: 0.0.40
codegen_flags: <defaults>
</compile_context>

<pallas_src>
import functools

import jax
import jax.numpy as jnp
from jax.experimental import pallas as pl
from jax.experimental.pallas import tpu as pltpu  # noqa: F401  (TPU backend)

# Synthetic representation dims (rep_dim is an external global in the original code).
rep_dim = {"pos": 3, "rot": 6, "vel": 3}

_LANE = 128     # lane-dense padded feature width unit
_HEAD_PAD = 8   # sublane pad for the per-head source-attention rows


def _round_up(x, m):
    return ((x + m - 1) // m) * m


def _gatdec_kernel(adj_ref, dec0_ref, tgt_ref, *refs, layer_cfg, negative_slope=0.2):
    """Fused GATDec forward: every GATConv layer of the stack in one kernel.

    refs = 5 weight refs per layer (wd, wt, asrc, adst, bias) followed by the
    single output ref.  layer_cfg is a static tuple of
    (heads, out_ch, has_tgt, apply_relu) per layer.
    """
    *w_refs, out_ref = refs

    adj = adj_ref[...]                                   # [Np, Np]
    mask = adj > 0.0                                     # hoisted: shared by all layers/heads
    neg_big = jnp.float32(-1e9)

    x = dec0_ref[...]                                    # [Np, Fp]  (zero-padded lanes)
    tgt = tgt_ref[...]                                   # [Np, Fp]
    col = jax.lax.broadcasted_iota(jnp.int32, x.shape, 1)  # head-block column ids

    for li, (heads, out_ch, has_tgt, apply_relu) in enumerate(layer_cfg):
        wd = w_refs[5 * li + 0][...]                     # [Fp, Fp]   W for dec_x part
        wt_ref = w_refs[5 * li + 1]                      # [Fp, Fp]   W for tgt_x part
        asrc = w_refs[5 * li + 2][...]                   # [Hpad, Fp] block rows (per head)
        adst = w_refs[5 * li + 3][...]                   # [Fp, 128]  block cols (per head)
        bias = w_refs[5 * li + 4][...]                   # [1, Fp]

        # Linear projection.  concat([dec_x, tgt_x]) @ W  ==  dec_x@Wd + tgt_x@Wt.
        h = jnp.dot(x, wd, preferred_element_type=jnp.float32)          # [Np, Fp]
        if has_tgt:
            h = h + jnp.dot(tgt, wt_ref[...], preferred_element_type=jnp.float32)

        # Attention logits for ALL heads at once (no per-head feature slices):
        #   alpha_src_t[hd, j] = <h_j, a_src[hd]>   (source-indexed, row layout)
        #   alpha_dst[i, hd]   = <h_i, a_dst[hd]>   (target-indexed, col layout)
        alpha_src_t = jax.lax.dot_general(
            asrc, h, (((1,), (1,)), ((), ())),
            preferred_element_type=jnp.float32)                          # [Hpad, Np]
        alpha_dst = jnp.dot(h, adst, preferred_element_type=jnp.float32)  # [Np, 128]

        out = jnp.zeros_like(h)
        for hd in range(heads):  # static, small (<= heads_num)
            # e[i, j] = LeakyReLU(alpha_dst[i] + alpha_src[j]) for edge j -> i
            e = alpha_dst[:, hd:hd + 1] + alpha_src_t[hd:hd + 1, :]      # [Np, Np]
            e = jnp.where(e >= 0.0, e, negative_slope * e)               # fused leaky-relu
            e = jnp.where(mask, e, neg_big)
            e = e - jnp.max(e, axis=-1, keepdims=True)
            p = jnp.exp(e)                                # masked entries underflow to 0
            p = p * pl.reciprocal(jnp.sum(p, axis=-1, keepdims=True), approx=True)
            # Aggregate with the full lane-dense h; select this head's output
            # block with a column mask (h's padded lanes are zero anyway).
            agg = jnp.dot(p, h, preferred_element_type=jnp.float32)      # [Np, Fp]
            head_cols = jnp.logical_and(col >= hd * out_ch, col < (hd + 1) * out_ch)
            out = out + jnp.where(head_cols, agg, 0.0)

        out = out + bias
        if apply_relu:
            out = jnp.maximum(out, 0.0)
        x = out

    out_ref[...] = x.astype(out_ref.dtype)


@functools.partial(jax.jit, static_argnames=("layer_cfg",))
def _gatdec_forward(adj, dec0, tgt, params, *, layer_cfg):
    n_pad, fp = dec0.shape
    flat = [a for lyr in params for a in lyr]
    kernel = functools.partial(_gatdec_kernel, layer_cfg=layer_cfg)
    return pl.pallas_call(
        kernel,
        out_shape=jax.ShapeDtypeStruct((n_pad, fp), jnp.float32),
    )(adj, dec0, tgt, *flat)


class GATDecPallas:
    """JAX/Pallas port of GATDec (whole stack fused into one TPU kernel)."""

    def __init__(self, rep_cfg, z_dim, dec_cfg, key):
        skel_dim = sum(rep_dim[k] for k in rep_cfg["skel"])
        out_dim = sum(rep_dim[k] for k in rep_cfg["out"])
        hid_lyrs = dec_cfg["hid_lyrs"]
        heads_num = dec_cfg["heads_num"]
        tgt_all_lyr = dec_cfg["tgt_all_lyr"]
        assert heads_num <= _HEAD_PAD, "heads_num > 8 not supported by this kernel"

        d_Fs = [skel_dim + z_dim] + hid_lyrs + [out_dim]
        n_layers = len(d_Fs) - 1

        # Per-layer meta + uniform lane-dense padded feature width.
        widths = [z_dim, skel_dim]
        layer_meta = []
        cur_in = z_dim
        for i, fi in enumerate(d_Fs[1:]):
            heads = heads_num if i != n_layers - 1 else 1
            has_tgt = bool(tgt_all_lyr or i == 0)
            layer_meta.append((cur_in, fi, heads, has_tgt))
            widths.append(heads * fi)
            cur_in = heads * fi
        fp = _round_up(max(widths), _LANE)

        self.skel_dim = skel_dim
        self.out_dim = out_dim
        self.z_dim = z_dim
        self.fp = fp
        self.tgt_all_lyr = tgt_all_lyr

        params = []
        cfg = []
        for i, (in_dec, fi, heads, has_tgt) in enumerate(layer_meta):
            fan_in = in_dec + (skel_dim if has_tgt else 0)
            key, k1, k2, k3 = jax.random.split(key, 4)
            w = jax.random.normal(k1, (fan_in, heads * fi), jnp.float32)
            w = w * (1.0 / jnp.sqrt(jnp.float32(fan_in)))
            a_src = 0.1 * jax.random.normal(k2, (heads, fi), jnp.float32)
            a_dst = 0.1 * jax.random.normal(k3, (heads, fi), jnp.float32)

            # Split W into the dec-feature and tgt-feature parts (== hstack @ W),
            # pad everything to the uniform lane-dense width fp.
            wd = jnp.zeros((fp, fp), jnp.float32).at[:in_dec, :heads * fi].set(w[:in_dec])
            wt = jnp.zeros((fp, fp), jnp.float32)
            if has_tgt:
                wt = wt.at[:skel_dim, :heads * fi].set(w[in_dec:])
            # Block-layout attention params (all heads in one matrix).
            asrc = jnp.zeros((_HEAD_PAD, fp), jnp.float32)
            adst = jnp.zeros((fp, _LANE), jnp.float32)
            for hd in range(heads):
                asrc = asrc.at[hd, hd * fi:(hd + 1) * fi].set(a_src[hd])
                adst = adst.at[hd * fi:(hd + 1) * fi, hd].set(a_dst[hd])
            bias = jnp.zeros((1, fp), jnp.float32)  # GATConv bias init = 0

            params.append((wd, wt, asrc, adst, bias))
            cfg.append((heads, fi, has_tgt, i + 1 != n_layers))

        self.params = tuple(params)
        self.layer_cfg = tuple(cfg)

    def __call__(self, src_z, batch, tgt_x, edge_index_bi, edge_mask_bi=None):
        # edge_mask_bi accepted for API parity but is a computational no-op:
        # GATConv here has no edge_dim, so edge_attr never enters the attention.
        n = tgt_x.shape[0]
        n_pad = _round_up(n, 8)
        fp = self.fp

        adj = jnp.zeros((n_pad, n_pad), jnp.float32)
        adj = adj.at[edge_index_bi[1], edge_index_bi[0]].set(1.0)   # edge j -> i
        adj = jnp.maximum(adj, jnp.eye(n_pad, dtype=jnp.float32))    # add_self_loops=True

        dec0 = jnp.zeros((n_pad, fp), jnp.float32).at[:n, :self.z_dim].set(src_z[batch])
        tgt = jnp.zeros((n_pad, fp), jnp.float32).at[:n, :self.skel_dim].set(tgt_x)

        out = _gatdec_forward(adj, dec0, tgt, self.params, layer_cfg=self.layer_cfg)
        return out[:n, :self.out_dim]


if __name__ == "__main__":
    key = jax.random.PRNGKey(0)
    rep_cfg = {"skel": ["pos", "rot"], "out": ["pos", "rot", "vel"]}  # skel=9, out=12
    z_dim = 16
    dec_cfg = {"hid_lyrs": [32, 32], "heads_num": 2, "tgt_all_lyr": True}

    key, km, kz, kx = jax.random.split(key, 4)
    model = GATDecPallas(rep_cfg, z_dim, dec_cfg, km)

    # Small synthetic graph batch: 2 graphs x 8 nodes, bidirectional chain edges.
    num_graphs, nodes_per_graph = 2, 8
    n_nodes = num_graphs * nodes_per_graph
    src_z = jax.random.normal(kz, (num_graphs, z_dim), jnp.float32)
    tgt_x = jax.random.normal(kx, (n_nodes, model.skel_dim), jnp.float32)
    batch = jnp.repeat(jnp.arange(num_graphs, dtype=jnp.int32), nodes_per_graph)

    srcs, dsts = [], []
    for g in range(num_graphs):
        off = g * nodes_per_graph
        for v in range(nodes_per_graph - 1):
            srcs += [off + v, off + v + 1]
            dsts += [off + v + 1, off + v]
    edge_index_bi = jnp.array([srcs, dsts], dtype=jnp.int32)
    edge_mask_bi = jnp.ones((edge_index_bi.shape[1],), jnp.float32)

    out = model(src_z, batch, tgt_x, edge_index_bi, edge_mask_bi)
    out = jax.block_until_ready(out)
    assert out.shape == (n_nodes, model.out_dim), out.shape
    assert bool(jnp.all(jnp.isfinite(out)))
    print("KERNEL_OK")
</pallas_src>

<mosaic_0001>
module attributes {stable_mosaic.version = 11 : i64} {
  func.func @_gatdec_kernel(%arg0: memref<16x16xf32, #tpu.memory_space<vmem>>, %arg1: memref<16x128xf32, #tpu.memory_space<vmem>>, %arg2: memref<16x128xf32, #tpu.memory_space<vmem>>, %arg3: memref<128x128xf32, #tpu.memory_space<vmem>>, %arg4: memref<128x128xf32, #tpu.memory_space<vmem>>, %arg5: memref<8x128xf32, #tpu.memory_space<vmem>>, %arg6: memref<128x128xf32, #tpu.memory_space<vmem>>, %arg7: memref<1x128xf32, #tpu.memory_space<vmem>>, %arg8: memref<128x128xf32, #tpu.memory_space<vmem>>, %arg9: memref<128x128xf32, #tpu.memory_space<vmem>>, %arg10: memref<8x128xf32, #tpu.memory_space<vmem>>, %arg11: memref<128x128xf32, #tpu.memory_space<vmem>>, %arg12: memref<1x128xf32, #tpu.memory_space<vmem>>, %arg13: memref<128x128xf32, #tpu.memory_space<vmem>>, %arg14: memref<128x128xf32, #tpu.memory_space<vmem>>, %arg15: memref<8x128xf32, #tpu.memory_space<vmem>>, %arg16: memref<128x128xf32, #tpu.memory_space<vmem>>, %arg17: memref<1x128xf32, #tpu.memory_space<vmem>>, %arg18: memref<16x128xf32, #tpu.memory_space<vmem>>) attributes {dimension_semantics = [], scalar_prefetch = 0 : i64, scratch_operands = 0 : i64, tpu.core_type = #tpu.core_type<tc>} {
    %c0 = arith.constant 0 : index
    %c0_0 = arith.constant 0 : index
    %0 = vector.load %arg0[%c0, %c0_0] : memref<16x16xf32, #tpu.memory_space<vmem>>, vector<16x16xf32>
    %cst = arith.constant 0.000000e+00 : f32
    %1 = vector.broadcast %cst : f32 to vector<16x16xf32>
    %2 = arith.cmpf ogt, %0, %1 : vector<16x16xf32>
    %c0_1 = arith.constant 0 : index
    %c0_2 = arith.constant 0 : index
    %3 = vector.load %arg1[%c0_1, %c0_2] : memref<16x128xf32, #tpu.memory_space<vmem>>, vector<16x128xf32>
    %c0_3 = arith.constant 0 : index
    %c0_4 = arith.constant 0 : index
    %4 = vector.load %arg2[%c0_3, %c0_4] : memref<16x128xf32, #tpu.memory_space<vmem>>, vector<16x128xf32>
    %5 = tpu.iota {dimensions = array<i32: 1>} : vector<16x128xi32>
    %c0_5 = arith.constant 0 : index
    %c0_6 = arith.constant 0 : index
    %6 = vector.load %arg3[%c0_5, %c0_6] : memref<128x128xf32, #tpu.memory_space<vmem>>, vector<128x128xf32>
    %c0_7 = arith.constant 0 : index
    %c0_8 = arith.constant 0 : index
    %7 = vector.load %arg5[%c0_7, %c0_8] : memref<8x128xf32, #tpu.memory_space<vmem>>, vector<8x128xf32>
    %c0_9 = arith.constant 0 : index
    %c0_10 = arith.constant 0 : index
    %8 = vector.load %arg6[%c0_9, %c0_10] : memref<128x128xf32, #tpu.memory_space<vmem>>, vector<128x128xf32>
    %c0_11 = arith.constant 0 : index
    %c0_12 = arith.constant 0 : index
    %9 = vector.load %arg7[%c0_11, %c0_12] : memref<1x128xf32, #tpu.memory_space<vmem>>, vector<1x128xf32>
    %cst_13 = arith.constant dense<0.000000e+00> : vector<16x128xf32>
    %10 = tpu.matmul %3, %6, %cst_13 {dimension_numbers = #tpu.dot_dimension_numbers<[1], [0], [0], [1], [0, 0, 1, 1], [], []>} : vector<16x128xf32>, vector<128x128xf32>, vector<16x128xf32> -> vector<16x128xf32>
    %c0_14 = arith.constant 0 : index
    %c0_15 = arith.constant 0 : index
    %11 = vector.load %arg4[%c0_14, %c0_15] : memref<128x128xf32, #tpu.memory_space<vmem>>, vector<128x128xf32>
    %cst_16 = arith.constant dense<0.000000e+00> : vector<16x128xf32>
    %12 = tpu.matmul %4, %11, %cst_16 {dimension_numbers = #tpu.dot_dimension_numbers<[1], [0], [0], [1], [0, 0, 1, 1], [], []>} : vector<16x128xf32>, vector<128x128xf32>, vector<16x128xf32> -> vector<16x128xf32>
    %13 = arith.addf %10, %12 : vector<16x128xf32>
    %cst_17 = arith.constant dense<0.000000e+00> : vector<8x16xf32>
    %14 = tpu.matmul %7, %13, %cst_17 {dimension_numbers = #tpu.dot_dimension_numbers<[1], [1], [0], [0], [0, 0, 1, 0], [], []>} : vector<8x128xf32>, vector<16x128xf32>, vector<8x16xf32> -> vector<8x16xf32>
    %cst_18 = arith.constant dense<0.000000e+00> : vector<16x128xf32>
    %15 = tpu.matmul %13, %8, %cst_18 {dimension_numbers = #tpu.dot_dimension_numbers<[1], [0], [0], [1], [0, 0, 1, 1], [], []>} : vector<16x128xf32>, vector<128x128xf32>, vector<16x128xf32> -> vector<16x128xf32>
    %cst_19 = arith.constant 0.000000e+00 : f32
    %16 = vector.broadcast %cst_19 : f32 to vector<16x128xf32>
    %17 = vector.extract_strided_slice %15 {offsets = [0, 0], sizes = [16, 1], strides = [1, 1]} : vector<16x128xf32> to vector<16x1xf32>
    %18 = vector.extract_strided_slice %14 {offsets = [0, 0], sizes = [1, 16], strides = [1, 1]} : vector<8x16xf32> to vector<1x16xf32>
    %19 = vector.broadcast %17 : vector<16x1xf32> to vector<16x16xf32>
    %20 = vector.broadcast %18 : vector<1x16xf32> to vector<16x16xf32>
    %21 = arith.addf %19, %20 : vector<16x16xf32>
    %cst_20 = arith.constant 0.000000e+00 : f32
    %22 = vector.broadcast %cst_20 : f32 to vector<16x16xf32>
    %23 = arith.cmpf oge, %21, %22 : vector<16x16xf32>
    %cst_21 = arith.constant 2.000000e-01 : f32
    %24 = vector.broadcast %cst_21 : f32 to vector<16x16xf32>
    %25 = arith.mulf %24, %21 : vector<16x16xf32>
    %26 = arith.select %23, %21, %25 : vector<16x16xi1>, vector<16x16xf32>
    %cst_22 = arith.constant -1.000000e+09 : f32
    %27 = vector.broadcast %cst_22 : f32 to vector<16x16xf32>
    %28 = arith.select %2, %26, %27 : vector<16x16xi1>, vector<16x16xf32>
    %cst_23 = arith.constant dense<0xFF800000> : vector<16xf32>
    %29 = vector.multi_reduction <maximumf>, %28, %cst_23 [1] : vector<16x16xf32> to vector<16xf32>
    %30 = vector.shape_cast %29 : vector<16xf32> to vector<16x1xf32>
    %31 = vector.broadcast %30 : vector<16x1xf32> to vector<16x16xf32>
    %32 = arith.subf %28, %31 : vector<16x16xf32>
    %33 = math.exp %32 : vector<16x16xf32>
    %cst_24 = arith.constant dense<0.000000e+00> : vector<16xf32>
    %34 = vector.multi_reduction <add>, %33, %cst_24 [1] : vector<16x16xf32> to vector<16xf32>
    %35 = vector.shape_cast %34 : vector<16xf32> to vector<16x1xf32>
    %36 = tpu.reciprocal %35 {approx = true} : vector<16x1xf32> -> vector<16x1xf32>
    %37 = vector.broadcast %36 : vector<16x1xf32> to vector<16x16xf32>
    %38 = arith.mulf %33, %37 : vector<16x16xf32>
    %cst_25 = arith.constant dense<0.000000e+00> : vector<16x128xf32>
    %39 = tpu.matmul %38, %13, %cst_25 {dimension_numbers = #tpu.dot_dimension_numbers<[1], [0], [0], [1], [0, 0, 1, 1], [], []>} : vector<16x16xf32>, vector<16x128xf32>, vector<16x128xf32> -> vector<16x128xf32>
    %c0_i32 = arith.constant 0 : i32
    %40 = vector.broadcast %c0_i32 : i32 to vector<16x128xi32>
    %41 = arith.cmpi sge, %5, %40 : vector<16x128xi32>
    %c32_i32 = arith.constant 32 : i32
    %42 = vector.broadcast %c32_i32 : i32 to vector<16x128xi32>
    %43 = arith.cmpi slt, %5, %42 : vector<16x128xi32>
    %44 = arith.andi %41, %43 : vector<16x128xi1>
    %cst_26 = arith.constant 0.000000e+00 : f32
    %45 = vector.broadcast %cst_26 : f32 to vector<16x128xf32>
    %46 = arith.select %44, %39, %45 : vector<16x128xi1>, vector<16x128xf32>
    %47 = arith.addf %16, %46 : vector<16x128xf32>
    %48 = vector.extract_strided_slice %15 {offsets = [0, 1], sizes = [16, 1], strides = [1, 1]} : vector<16x128xf32> to vector<16x1xf32>
    %49 = vector.extract_strided_slice %14 {offsets = [1, 0], sizes = [1, 16], strides = [1, 1]} : vector<8x16xf32> to vector<1x16xf32>
    %50 = vector.broadcast %48 : vector<16x1xf32> to vector<16x16xf32>
    %51 = vector.broadcast %49 : vector<1x16xf32> to vector<16x16xf32>
    %52 = arith.addf %50, %51 : vector<16x16xf32>
    %cst_27 = arith.constant 0.000000e+00 : f32
    %53 = vector.broadcast %cst_27 : f32 to vector<16x16xf32>
    %54 = arith.cmpf oge, %52, %53 : vector<16x16xf32>
    %cst_28 = arith.constant 2.000000e-01 : f32
    %55 = vector.broadcast %cst_28 : f32 to vector<16x16xf32>
    %56 = arith.mulf %55, %52 : vector<16x16xf32>
    %57 = arith.select %54, %52, %56 : vector<16x16xi1>, vector<16x16xf32>
    %cst_29 = arith.constant -1.000000e+09 : f32
    %58 = vector.broadcast %cst_29 : f32 to vector<16x16xf32>
    %59 = arith.select %2, %57, %58 : vector<16x16xi1>, vector<16x16xf32>
    %cst_30 = arith.constant dense<0xFF800000> : vector<16xf32>
    %60 = vector.multi_reduction <maximumf>, %59, %cst_30 [1] : vector<16x16xf32> to vector<16xf32>
    %61 = vector.shape_cast %60 : vector<16xf32> to vector<16x1xf32>
    %62 = vector.broadcast %61 : vector<16x1xf32> to vector<16x16xf32>
    %63 = arith.subf %59, %62 : vector<16x16xf32>
    %64 = math.exp %63 : vector<16x16xf32>
    %cst_31 = arith.constant dense<0.000000e+00> : vector<16xf32>
    %65 = vector.multi_reduction <add>, %64, %cst_31 [1] : vector<16x16xf32> to vector<16xf32>
    %66 = vector.shape_cast %65 : vector<16xf32> to vector<16x1xf32>
    %67 = tpu.reciprocal %66 {approx = true} : vector<16x1xf32> -> vector<16x1xf32>
    %68 = vector.broadcast %67 : vector<16x1xf32> to vector<16x16xf32>
    %69 = arith.mulf %64, %68 : vector<16x16xf32>
    %cst_32 = arith.constant dense<0.000000e+00> : vector<16x128xf32>
    %70 = tpu.matmul %69, %13, %cst_32 {dimension_numbers = #tpu.dot_dimension_numbers<[1], [0], [0], [1], [0, 0, 1, 1], [], []>} : vector<16x16xf32>, vector<16x128xf32>, vector<16x128xf32> -> vector<16x128xf32>
    %c32_i32_33 = arith.constant 32 : i32
    %71 = vector.broadcast %c32_i32_33 : i32 to vector<16x128xi32>
    %72 = arith.cmpi sge, %5, %71 : vector<16x128xi32>
    %c64_i32 = arith.constant 64 : i32
    %73 = vector.broadcast %c64_i32 : i32 to vector<16x128xi32>
    %74 = arith.cmpi slt, %5, %73 : vector<16x128xi32>
    %75 = arith.andi %72, %74 : vector<16x128xi1>
    %cst_34 = arith.constant 0.000000e+00 : f32
    %76 = vector.broadcast %cst_34 : f32 to vector<16x128xf32>
    %77 = arith.select %75, %70, %76 : vector<16x128xi1>, vector<16x128xf32>
    %78 = arith.addf %47, %77 : vector<16x128xf32>
    %79 = vector.broadcast %9 : vector<1x128xf32> to vector<16x128xf32>
    %80 = arith.addf %78, %79 : vector<16x128xf32>
    %cst_35 = arith.constant 0.000000e+00 : f32
    %81 = vector.broadcast %cst_35 : f32 to vector<16x128xf32>
    %82 = arith.maximumf %80, %81 : vector<16x128xf32>
    %c0_36 = arith.constant 0 : index
    %c0_37 = arith.constant 0 : index
    %83 = vector.load %arg8[%c0_36, %c0_37] : memref<128x128xf32, #tpu.memory_space<vmem>>, vector<128x128xf32>
    %c0_38 = arith.constant 0 : index
    %c0_39 = arith.constant 0 : index
    %84 = vector.load %arg10[%c0_38, %c0_39] : memref<8x128xf32, #tpu.memory_space<vmem>>, vector<8x128xf32>
    %c0_40 = arith.constant 0 : index
    %c0_41 = arith.constant 0 : index
    %85 = vector.load %arg11[%c0_40, %c0_41] : memref<128x128xf32, #tpu.memory_space<vmem>>, vector<128x128xf32>
    %c0_42 = arith.constant 0 : index
    %c0_43 = arith.constant 0 : index
    %86 = vector.load %arg12[%c0_42, %c0_43] : memref<1x128xf32, #tpu.memory_space<vmem>>, vector<1x128xf32>
    %cst_44 = arith.constant dense<0.000000e+00> : vector<16x128xf32>
    %87 = tpu.matmul %82, %83, %cst_44 {dimension_numbers = #tpu.dot_dimension_numbers<[1], [0], [0], [1], [0, 0, 1, 1], [], []>} : vector<16x128xf32>, vector<128x128xf32>, vector<16x128xf32> -> vector<16x128xf32>
    %c0_45 = arith.constant 0 : index
    %c0_46 = arith.constant 0 : index
    %88 = vector.load %arg9[%c0_45, %c0_46] : memref<128x128xf32, #tpu.memory_space<vmem>>, vector<128x128xf32>
    %cst_47 = arith.constant dense<0.000000e+00> : vector<16x128xf32>
    %89 = tpu.matmul %4, %88, %cst_47 {dimension_numbers = #tpu.dot_dimension_numbers<[1], [0], [0], [1], [0, 0, 1, 1], [], []>} : vector<16x128xf32>, vector<128x128xf32>, vector<16x128xf32> -> vector<16x128xf32>
    %90 = arith.addf %87, %89 : vector<16x128xf32>
    %cst_48 = arith.constant dense<0.000000e+00> : vector<8x16xf32>
    %91 = tpu.matmul %84, %90, %cst_48 {dimension_numbers = #tpu.dot_dimension_numbers<[1], [1], [0], [0], [0, 0, 1, 0], [], []>} : vector<8x128xf32>, vector<16x128xf32>, vector<8x16xf32> -> vector<8x16xf32>
    %cst_49 = arith.constant dense<0.000000e+00> : vector<16x128xf32>
    %92 = tpu.matmul %90, %85, %cst_49 {dimension_numbers = #tpu.dot_dimension_numbers<[1], [0], [0], [1], [0, 0, 1, 1], [], []>} : vector<16x128xf32>, vector<128x128xf32>, vector<16x128xf32> -> vector<16x128xf32>
    %cst_50 = arith.constant 0.000000e+00 : f32
    %93 = vector.broadcast %cst_50 : f32 to vector<16x128xf32>
    %94 = vector.extract_strided_slice %92 {offsets = [0, 0], sizes = [16, 1], strides = [1, 1]} : vector<16x128xf32> to vector<16x1xf32>
    %95 = vector.extract_strided_slice %91 {offsets = [0, 0], sizes = [1, 16], strides = [1, 1]} : vector<8x16xf32> to vector<1x16xf32>
    %96 = vector.broadcast %94 : vector<16x1xf32> to vector<16x16xf32>
    %97 = vector.broadcast %95 : vector<1x16xf32> to vector<16x16xf32>
    %98 = arith.addf %96, %97 : vector<16x16xf32>
    %cst_51 = arith.constant 0.000000e+00 : f32
    %99 = vector.broadcast %cst_51 : f32 to vector<16x16xf32>
    %100 = arith.cmpf oge, %98, %99 : vector<16x16xf32>
    %cst_52 = arith.constant 2.000000e-01 : f32
    %101 = vector.broadcast %cst_52 : f32 to vector<16x16xf32>
    %102 = arith.mulf %101, %98 : vector<16x16xf32>
    %103 = arith.select %100, %98, %102 : vector<16x16xi1>, vector<16x16xf32>
    %cst_53 = arith.constant -1.000000e+09 : f32
    %104 = vector.broadcast %cst_53 : f32 to vector<16x16xf32>
    %105 = arith.select %2, %103, %104 : vector<16x16xi1>, vector<16x16xf32>
    %cst_54 = arith.constant dense<0xFF800000> : vector<16xf32>
    %106 = vector.multi_reduction <maximumf>, %105, %cst_54 [1] : vector<16x16xf32> to vector<16xf32>
    %107 = vector.shape_cast %106 : vector<16xf32> to vector<16x1xf32>
    %108 = vector.broadcast %107 : vector<16x1xf32> to vector<16x16xf32>
    %109 = arith.subf %105, %108 : vector<16x16xf32>
    %110 = math.exp %109 : vector<16x16xf32>
    %cst_55 = arith.constant dense<0.000000e+00> : vector<16xf32>
    %111 = vector.multi_reduction <add>, %110, %cst_55 [1] : vector<16x16xf32> to vector<16xf32>
    %112 = vector.shape_cast %111 : vector<16xf32> to vector<16x1xf32>
    %113 = tpu.reciprocal %112 {approx = true} : vector<16x1xf32> -> vector<16x1xf32>
    %114 = vector.broadcast %113 : vector<16x1xf32> to vector<16x16xf32>
    %115 = arith.mulf %110, %114 : vector<16x16xf32>
    %cst_56 = arith.constant dense<0.000000e+00> : vector<16x128xf32>
    %116 = tpu.matmul %115, %90, %cst_56 {dimension_numbers = #tpu.dot_dimension_numbers<[1], [0], [0], [1], [0, 0, 1, 1], [], []>} : vector<16x16xf32>, vector<16x128xf32>, vector<16x128xf32> -> vector<16x128xf32>
    %c0_i32_57 = arith.constant 0 : i32
    %117 = vector.broadcast %c0_i32_57 : i32 to vector<16x128xi32>
    %118 = arith.cmpi sge, %5, %117 : vector<16x128xi32>
    %c32_i32_58 = arith.constant 32 : i32
    %119 = vector.broadcast %c32_i32_58 : i32 to vector<16x128xi32>
    %120 = arith.cmpi slt, %5, %119 : vector<16x128xi32>
    %121 = arith.andi %118, %120 : vector<16x128xi1>
    %cst_59 = arith.constant 0.000000e+00 : f32
    %122 = vector.broadcast %cst_59 : f32 to vector<16x128xf32>
    %123 = arith.select %121, %116, %122 : vector<16x128xi1>, vector<16x128xf32>
    %124 = arith.addf %93, %123 : vector<16x128xf32>
    %125 = vector.extract_strided_slice %92 {offsets = [0, 1], sizes = [16, 1], strides = [1, 1]} : vector<16x128xf32> to vector<16x1xf32>
    %126 = vector.extract_strided_slice %91 {offsets = [1, 0], sizes = [1, 16], strides = [1, 1]} : vector<8x16xf32> to vector<1x16xf32>
    %127 = vector.broadcast %125 : vector<16x1xf32> to vector<16x16xf32>
    %128 = vector.broadcast %126 : vector<1x16xf32> to vector<16x16xf32>
    %129 = arith.addf %127, %128 : vector<16x16xf32>
    %cst_60 = arith.constant 0.000000e+00 : f32
    %130 = vector.broadcast %cst_60 : f32 to vector<16x16xf32>
    %131 = arith.cmpf oge, %129, %130 : vector<16x16xf32>
    %cst_61 = arith.constant 2.000000e-01 : f32
    %132 = vector.broadcast %cst_61 : f32 to vector<16x16xf32>
    %133 = arith.mulf %132, %129 : vector<16x16xf32>
    %134 = arith.select %131, %129, %133 : vector<16x16xi1>, vector<16x16xf32>
    %cst_62 = arith.constant -1.000000e+09 : f32
    %135 = vector.broadcast %cst_62 : f32 to vector<16x16xf32>
    %136 = arith.select %2, %134, %135 : vector<16x16xi1>, vector<16x16xf32>
    %cst_63 = arith.constant dense<0xFF800000> : vector<16xf32>
    %137 = vector.multi_reduction <maximumf>, %136, %cst_63 [1] : vector<16x16xf32> to vector<16xf32>
    %138 = vector.shape_cast %137 : vector<16xf32> to vector<16x1xf32>
    %139 = vector.broadcast %138 : vector<16x1xf32> to vector<16x16xf32>
    %140 = arith.subf %136, %139 : vector<16x16xf32>
    %141 = math.exp %140 : vector<16x16xf32>
    %cst_64 = arith.constant dense<0.000000e+00> : vector<16xf32>
    %142 = vector.multi_reduction <add>, %141, %cst_64 [1] : vector<16x16xf32> to vector<16xf32>
    %143 = vector.shape_cast %142 : vector<16xf32> to vector<16x1xf32>
    %144 = tpu.reciprocal %143 {approx = true} : vector<16x1xf32> -> vector<16x1xf32>
    %145 = vector.broadcast %144 : vector<16x1xf32> to vector<16x16xf32>
    %146 = arith.mulf %141, %145 : vector<16x16xf32>
    %cst_65 = arith.constant dense<0.000000e+00> : vector<16x128xf32>
    %147 = tpu.matmul %146, %90, %cst_65 {dimension_numbers = #tpu.dot_dimension_numbers<[1], [0], [0], [1], [0, 0, 1, 1], [], []>} : vector<16x16xf32>, vector<16x128xf32>, vector<16x128xf32> -> vector<16x128xf32>
    %c32_i32_66 = arith.constant 32 : i32
    %148 = vector.broadcast %c32_i32_66 : i32 to vector<16x128xi32>
    %149 = arith.cmpi sge, %5, %148 : vector<16x128xi32>
    %c64_i32_67 = arith.constant 64 : i32
    %150 = vector.broadcast %c64_i32_67 : i32 to vector<16x128xi32>
    %151 = arith.cmpi slt, %5, %150 : vector<16x128xi32>
    %152 = arith.andi %149, %151 : vector<16x128xi1>
    %cst_68 = arith.constant 0.000000e+00 : f32
    %153 = vector.broadcast %cst_68 : f32 to vector<16x128xf32>
    %154 = arith.select %152, %147, %153 : vector<16x128xi1>, vector<16x128xf32>
    %155 = arith.addf %124, %154 : vector<16x128xf32>
    %156 = vector.broadcast %86 : vector<1x128xf32> to vector<16x128xf32>
    %157 = arith.addf %155, %156 : vector<16x128xf32>
    %cst_69 = arith.constant 0.000000e+00 : f32
    %158 = vector.broadcast %cst_69 : f32 to vector<16x128xf32>
    %159 = arith.maximumf %157, %158 : vector<16x128xf32>
    %c0_70 = arith.constant 0 : index
    %c0_71 = arith.constant 0 : index
    %160 = vector.load %arg13[%c0_70, %c0_71] : memref<128x128xf32, #tpu.memory_space<vmem>>, vector<128x128xf32>
    %c0_72 = arith.constant 0 : index
    %c0_73 = arith.constant 0 : index
    %161 = vector.load %arg15[%c0_72, %c0_73] : memref<8x128xf32, #tpu.memory_space<vmem>>, vector<8x128xf32>
    %c0_74 = arith.constant 0 : index
    %c0_75 = arith.constant 0 : index
    %162 = vector.load %arg16[%c0_74, %c0_75] : memref<128x128xf32, #tpu.memory_space<vmem>>, vector<128x128xf32>
    %c0_76 = arith.constant 0 : index
    %c0_77 = arith.constant 0 : index
    %163 = vector.load %arg17[%c0_76, %c0_77] : memref<1x128xf32, #tpu.memory_space<vmem>>, vector<1x128xf32>
    %cst_78 = arith.constant dense<0.000000e+00> : vector<16x128xf32>
    %164 = tpu.matmul %159, %160, %cst_78 {dimension_numbers = #tpu.dot_dimension_numbers<[1], [0], [0], [1], [0, 0, 1, 1], [], []>} : vector<16x128xf32>, vector<128x128xf32>, vector<16x128xf32> -> vector<16x128xf32>
    %c0_79 = arith.constant 0 : index
    %c0_80 = arith.constant 0 : index
    %165 = vector.load %arg14[%c0_79, %c0_80] : memref<128x128xf32, #tpu.memory_space<vmem>>, vector<128x128xf32>
    %cst_81 = arith.constant dense<0.000000e+00> : vector<16x128xf32>
    %166 = tpu.matmul %4, %165, %cst_81 {dimension_numbers = #tpu.dot_dimension_numbers<[1], [0], [0], [1], [0, 0, 1, 1], [], []>} : vector<16x128xf32>, vector<128x128xf32>, vector<16x128xf32> -> vector<16x128xf32>
    %167 = arith.addf %164, %166 : vector<16x128xf32>
    %cst_82 = arith.constant dense<0.000000e+00> : vector<8x16xf32>
    %168 = tpu.matmul %161, %167, %cst_82 {dimension_numbers = #tpu.dot_dimension_numbers<[1], [1], [0], [0], [0, 0, 1, 0], [], []>} : vector<8x128xf32>, vector<16x128xf32>, vector<8x16xf32> -> vector<8x16xf32>
    %cst_83 = arith.constant dense<0.000000e+00> : vector<16x128xf32>
    %169 = tpu.matmul %167, %162, %cst_83 {dimension_numbers = #tpu.dot_dimension_numbers<[1], [0], [0], [1], [0, 0, 1, 1], [], []>} : vector<16x128xf32>, vector<128x128xf32>, vector<16x128xf32> -> vector<16x128xf32>
    %cst_84 = arith.constant 0.000000e+00 : f32
    %170 = vector.broadcast %cst_84 : f32 to vector<16x128xf32>
    %171 = vector.extract_strided_slice %169 {offsets = [0, 0], sizes = [16, 1], strides = [1, 1]} : vector<16x128xf32> to vector<16x1xf32>
    %172 = vector.extract_strided_slice %168 {offsets = [0, 0], sizes = [1, 16], strides = [1, 1]} : vector<8x16xf32> to vector<1x16xf32>
    %173 = vector.broadcast %171 : vector<16x1xf32> to vector<16x16xf32>
    %174 = vector.broadcast %172 : vector<1x16xf32> to vector<16x16xf32>
    %175 = arith.addf %173, %174 : vector<16x16xf32>
    %cst_85 = arith.constant 0.000000e+00 : f32
    %176 = vector.broadcast %cst_85 : f32 to vector<16x16xf32>
    %177 = arith.cmpf oge, %175, %176 : vector<16x16xf32>
    %cst_86 = arith.constant 2.000000e-01 : f32
    %178 = vector.broadcast %cst_86 : f32 to vector<16x16xf32>
    %179 = arith.mulf %178, %175 : vector<16x16xf32>
    %180 = arith.select %177, %175, %179 : vector<16x16xi1>, vector<16x16xf32>
    %cst_87 = arith.constant -1.000000e+09 : f32
    %181 = vector.broadcast %cst_87 : f32 to vector<16x16xf32>
    %182 = arith.select %2, %180, %181 : vector<16x16xi1>, vector<16x16xf32>
    %cst_88 = arith.constant dense<0xFF800000> : vector<16xf32>
    %183 = vector.multi_reduction <maximumf>, %182, %cst_88 [1] : vector<16x16xf32> to vector<16xf32>
    %184 = vector.shape_cast %183 : vector<16xf32> to vector<16x1xf32>
    %185 = vector.broadcast %184 : vector<16x1xf32> to vector<16x16xf32>
    %186 = arith.subf %182, %185 : vector<16x16xf32>
    %187 = math.exp %186 : vector<16x16xf32>
    %cst_89 = arith.constant dense<0.000000e+00> : vector<16xf32>
    %188 = vector.multi_reduction <add>, %187, %cst_89 [1] : vector<16x16xf32> to vector<16xf32>
    %189 = vector.shape_cast %188 : vector<16xf32> to vector<16x1xf32>
    %190 = tpu.reciprocal %189 {approx = true} : vector<16x1xf32> -> vector<16x1xf32>
    %191 = vector.broadcast %190 : vector<16x1xf32> to vector<16x16xf32>
    %192 = arith.mulf %187, %191 : vector<16x16xf32>
    %cst_90 = arith.constant dense<0.000000e+00> : vector<16x128xf32>
    %193 = tpu.matmul %192, %167, %cst_90 {dimension_numbers = #tpu.dot_dimension_numbers<[1], [0], [0], [1], [0, 0, 1, 1], [], []>} : vector<16x16xf32>, vector<16x128xf32>, vector<16x128xf32> -> vector<16x128xf32>
    %c0_i32_91 = arith.constant 0 : i32
    %194 = vector.broadcast %c0_i32_91 : i32 to vector<16x128xi32>
    %195 = arith.cmpi sge, %5, %194 : vector<16x128xi32>
    %c12_i32 = arith.constant 12 : i32
    %196 = vector.broadcast %c12_i32 : i32 to vector<16x128xi32>
    %197 = arith.cmpi slt, %5, %196 : vector<16x128xi32>
    %198 = arith.andi %195, %197 : vector<16x128xi1>
    %cst_92 = arith.constant 0.000000e+00 : f32
    %199 = vector.broadcast %cst_92 : f32 to vector<16x128xf32>
    %200 = arith.select %198, %193, %199 : vector<16x128xi1>, vector<16x128xf32>
    %201 = arith.addf %170, %200 : vector<16x128xf32>
    %202 = vector.broadcast %163 : vector<1x128xf32> to vector<16x128xf32>
    %203 = arith.addf %201, %202 : vector<16x128xf32>
    %c0_93 = arith.constant 0 : index
    %c0_94 = arith.constant 0 : index
    %204 = vector.load %arg18[%c0_93, %c0_94] : memref<16x128xf32, #tpu.memory_space<vmem>>, vector<16x128xf32>
    tpu.vector_store %arg18[%c0_93, %c0_94], %203 {strides = array<i32>} : memref<16x128xf32, #tpu.memory_space<vmem>>, vector<16x128xf32>,
    return
  }
}

</mosaic_0001>

<llo_original>
// kernel: _gatdec_forward.1
$region0: #{_gatdec_forward.1}
  #allocation0 [shape = 'u32[]', space=smem, size = 0x4, offset = 0x4, fixed_abs, tag = 'smem constant byte address 0x4 - core index']
  #allocation1 [shape = 'u32[144,128]{1,0:T(1,128)}', space=vmem, size = 0x12000, scoped, tag = 'internal scratch']
  %s0 = inlined_call_operand.hbm [shape: f32[16,16], index: 0, kind: input, shape index: {}]
  %s1 = inlined_call_operand.hbm [shape: f32[16,128], index: 1, kind: input, shape index: {}]
  %s2 = inlined_call_operand.hbm [shape: f32[16,128], index: 2, kind: input, shape index: {}]
  %s3 = inlined_call_operand.hbm [shape: f32[128,128], index: 3, kind: input, shape index: {}]
  %s4 = inlined_call_operand.hbm [shape: f32[128,128], index: 4, kind: input, shape index: {}]
  %s5 = inlined_call_operand.vmem [shape: f32[8,128], index: 5, kind: input, shape index: {}]
  %s6 = inlined_call_operand.hbm [shape: f32[128,128], index: 6, kind: input, shape index: {}]
  %s7 = inlined_call_operand.vmem [shape: f32[1,128], index: 7, kind: input, shape index: {}]
  %s8 = inlined_call_operand.hbm [shape: f32[128,128], index: 8, kind: input, shape index: {}]
  %s9 = inlined_call_operand.hbm [shape: f32[128,128], index: 9, kind: input, shape index: {}]
  %s10 = inlined_call_operand.vmem [shape: f32[8,128], index: 10, kind: input, shape index: {}]
  %s11 = inlined_call_operand.hbm [shape: f32[128,128], index: 11, kind: input, shape index: {}]
  %s12 = inlined_call_operand.vmem [shape: f32[1,128], index: 12, kind: input, shape index: {}]
  %s13 = inlined_call_operand.hbm [shape: f32[128,128], index: 13, kind: input, shape index: {}]
  %s14 = inlined_call_operand.hbm [shape: f32[128,128], index: 14, kind: input, shape index: {}]
  %s15 = inlined_call_operand.vmem [shape: f32[8,128], index: 15, kind: input, shape index: {}]
  %s16 = inlined_call_operand.hbm [shape: f32[128,128], index: 16, kind: input, shape index: {}]
  %s17 = inlined_call_operand.vmem [shape: f32[1,128], index: 17, kind: input, shape index: {}]
  %s18 = inlined_call_operand.hbm [shape: f32[16,128], index: 18, kind: output, shape index: {}]
  %s19 = sld [smem:[#allocation0]]
  $region130: #{_gatdec_forward.1} parent=0
    _
  %s21 = ssub.s32 1, %s19
  %s22 = scalar_select 0, %s21, %s19
  $region1: #{_gatdec_forward.1} parent=0
    #allocation2 [shape = 'u8[8192]{0}', space=vmem, size = 0x2000, scoped, tag = 'input window, operand 0, single buffered']
    #allocation3 [shape = 's32[1]{0}', space=sflag, size = 0x4, scoped, tag = 'scoped memory for _gatdec_forward.1']
    #allocation4 [shape = 's32[1]{0}', space=sflag, size = 0x4, scoped, tag = 'scoped memory for _gatdec_forward.1']
    #allocation5 [shape = 'u8[8192]{0}', space=vmem, size = 0x2000, scoped, tag = 'input window, operand 1, single buffered']
    #allocation6 [shape = 's32[1]{0}', space=sflag, size = 0x4, scoped, tag = 'scoped memory for _gatdec_forward.1']
    #allocation7 [shape = 'u8[8192]{0}', space=vmem, size = 0x2000, scoped, tag = 'input window, operand 2, single buffered']
    #allocation8 [shape = 'u8[65536]{0}', space=vmem, size = 0x10000, scoped, tag = 'input window, operand 3, single buffered']
    #allocation9 [shape = 's32[1]{0}', space=sflag, size = 0x4, scoped, tag = 'scoped memory for _gatdec_forward.1']
    #allocation10 [shape = 'u8[65536]{0}', space=vmem, size = 0x10000, scoped, tag = 'input window, operand 4, single buffered']
    #allocation11 [shape = 'u8[65536]{0}', space=vmem, size = 0x10000, scoped, tag = 'input window, operand 6, single buffered']
    #allocation12 [shape = 's32[1]{0}', space=sflag, size = 0x4, scoped, tag = 'scoped memory for _gatdec_forward.1']
    #allocation13 [shape = 'u8[65536]{0}', space=vmem, size = 0x10000, scoped, tag = 'input window, operand 8, single buffered']
    #allocation14 [shape = 'u8[65536]{0}', space=vmem, size = 0x10000, scoped, tag = 'input window, operand 9, single buffered']
    #allocation15 [shape = 's32[1]{0}', space=sflag, size = 0x4, scoped, tag = 'scoped memory for _gatdec_forward.1']
    #allocation16 [shape = 'u8[65536]{0}', space=vmem, size = 0x10000, scoped, tag = 'input window, operand 11, single buffered']
    #allocation17 [shape = 'u8[65536]{0}', space=vmem, size = 0x10000, scoped, tag = 'input window, operand 13, single buffered']
    #allocation18 [shape = 's32[1]{0}', space=sflag, size = 0x4, scoped, tag = 'scoped memory for _gatdec_forward.1']
    #allocation19 [shape = 'u8[65536]{0}', space=vmem, size = 0x10000, scoped, tag = 'input window, operand 14, single buffered']
    #allocation20 [shape = 'u8[65536]{0}', space=vmem, size = 0x10000, scoped, tag = 'input window, operand 16, single buffered']
    #allocation21 [shape = 's32[1]{0}', space=sflag, size = 0x4, scoped, tag = 'scoped memory for _gatdec_forward.1']
    #allocation22 [shape = 'u8[8192]{0}', space=vmem, size = 0x2000, scoped, tag = 'output window, operand 0, single buffered']
    %23 = vsyncpa [#allocation3], 0
    %24 = vsyncpa [#allocation6], 0
    %25 = vsyncpa [#allocation9], 0
    %26 = vsyncpa [#allocation12], 0
    %27 = vsyncpa [#allocation15], 0
    %28 = vsyncpa [#allocation18], 0
    %29 = vsyncpa [#allocation21], 0
    %30 = vsyncpa [#allocation4], 0
    // Predicated region
    $region2: #{_gatdec_forward.1} parent=1 // pred_check
      _
    $region3: #{_gatdec_forward.1} parent=1 // pred_check_branch
      %32 = sbr.rel (0) target = $region5
    $region4: #{_gatdec_forward.1} parent=1 // pred_region
      %s34 = ssub.s32 256, 256
      %35 = vsyncadd [#allocation3], %s34
      %s36 = sshll.u32 [#allocation2], 4
      %s37 = int_to_ptr.vmem [resolvable:$true] %s36
      %42 = dma.hbm_to_vmem [thread:$0]  %s0, 256, %s37, [#allocation3], 128, 128, 8
    $region5: #{_gatdec_forward.1} parent=1 // pred_fallthru
      _
    // Predicated region
    $region6: #{_gatdec_forward.1} parent=1 // pred_check
      _
    $region7: #{_gatdec_forward.1} parent=1 // pred_check_branch
      %44 = sbr.rel (0) target = $region9
    $region8: #{_gatdec_forward.1} parent=1 // pred_region
      %s46 = ssub.s32 256, 256
      %47 = vsyncadd [#allocation6], %s46
      %s48 = sshll.u32 [#allocation5], 4
      %s49 = int_to_ptr.vmem [resolvable:$true] %s48
      %54 = dma.hbm_to_vmem [thread:$0]  %s1, 256, %s49, [#allocation6], 128, 128, 8
    $region9: #{_gatdec_forward.1} parent=1 // pred_fallthru
      _
    // Predicated region
    $region10: #{_gatdec_forward.1} parent=1 // pred_check
      _
    $region11: #{_gatdec_forward.1} parent=1 // pred_check_branch
      %56 = sbr.rel (0) target = $region13
    $region12: #{_gatdec_forward.1} parent=1 // pred_region
      %s58 = ssub.s32 256, 256
      %59 = vsyncadd [#allocation6], %s58
      %s60 = sshll.u32 [#allocation7], 4
      %s61 = int_to_ptr.vmem [resolvable:$true] %s60
      %66 = dma.hbm_to_vmem [thread:$0]  %s2, 256, %s61, [#allocation6], 128, 128, 8
    $region13: #{_gatdec_forward.1} parent=1 // pred_fallthru
      _
    // Predicated region
    $region14: #{_gatdec_forward.1} parent=1 // pred_check
      _
    $region15: #{_gatdec_forward.1} parent=1 // pred_check_branch
      %68 = sbr.rel (0) target = $region17
    $region16: #{_gatdec_forward.1} parent=1 // pred_region
      %s70 = ssub.s32 2048, 2048
      %71 = vsyncadd [#allocation9], %s70
      %s72 = sshll.u32 [#allocation8], 4
      %s73 = int_to_ptr.vmem [resolvable:$true] %s72
      %78 = dma.hbm_to_vmem [thread:$0]  %s3, 2048, %s73, [#allocation9], 128, 128, 8
    $region17: #{_gatdec_forward.1} parent=1 // pred_fallthru
      _
    // Predicated region
    $region18: #{_gatdec_forward.1} parent=1 // pred_check
      _
    $region19: #{_gatdec_forward.1} parent=1 // pred_check_branch
      %80 = sbr.rel (0) target = $region21
    $region20: #{_gatdec_forward.1} parent=1 // pred_region
      %s82 = ssub.s32 2048, 2048
      %83 = vsyncadd [#allocation9], %s82
      %s84 = sshll.u32 [#allocation10], 4
      %s85 = int_to_ptr.vmem [resolvable:$true] %s84
      %90 = dma.hbm_to_vmem [thread:$0]  %s4, 2048, %s85, [#allocation9], 128, 128, 8
    $region21: #{_gatdec_forward.1} parent=1 // pred_fallthru
      _
    // Predicated region
    $region22: #{_gatdec_forward.1} parent=1 // pred_check
      _
    $region23: #{_gatdec_forward.1} parent=1 // pred_check_branch
      %92 = sbr.rel (0) target = $region25
    $region24: #{_gatdec_forward.1} parent=1 // pred_region
      _
    $region25: #{_gatdec_forward.1} parent=1 // pred_fallthru
      _
    // Predicated region
    $region26: #{_gatdec_forward.1} parent=1 // pred_check
      _
    $region27: #{_gatdec_forward.1} parent=1 // pred_check_branch
      %94 = sbr.rel (0) target = $region29
    $region28: #{_gatdec_forward.1} parent=1 // pred_region
      %s96 = ssub.s32 2048, 2048
      %97 = vsyncadd [#allocation12], %s96
      %s98 = sshll.u32 [#allocation11], 4
      %s99 = int_to_ptr.vmem [resolvable:$true] %s98
      %104 = dma.hbm_to_vmem [thread:$0]  %s6, 2048, %s99, [#allocation12], 128, 128, 8
    $region29: #{_gatdec_forward.1} parent=1 // pred_fallthru
      _
    // Predicated region
    $region30: #{_gatdec_forward.1} parent=1 // pred_check
      _
    $region31: #{_gatdec_forward.1} parent=1 // pred_check_branch
      %106 = sbr.rel (0) target = $region33
    $region32: #{_gatdec_forward.1} parent=1 // pred_region
      _
    $region33: #{_gatdec_forward.1} parent=1 // pred_fallthru
      _
    // Predicated region
    $region34: #{_gatdec_forward.1} parent=1 // pred_check
      _
    $region35: #{_gatdec_forward.1} parent=1 // pred_check_branch
      %108 = sbr.rel (0) target = $region37
    $region36: #{_gatdec_forward.1} parent=1 // pred_region
      %s110 = ssub.s32 2048, 2048
      %111 = vsyncadd [#allocation12], %s110
      %s112 = sshll.u32 [#allocation13], 4
      %s113 = int_to_ptr.vmem [resolvable:$true] %s112
      %118 = dma.hbm_to_vmem [thread:$0]  %s8, 2048, %s113, [#allocation12], 128, 128, 8
    $region37: #{_gatdec_forward.1} parent=1 // pred_fallthru
      _
    // Predicated region
    $region38: #{_gatdec_forward.1} parent=1 // pred_check
      _
    $region39: #{_gatdec_forward.1} parent=1 // pred_check_branch
      %120 = sbr.rel (0) target = $region41
    $region40: #{_gatdec_forward.1} parent=1 // pred_region
      %s122 = ssub.s32 2048, 2048
      %123 = vsyncadd [#allocation15], %s122
      %s124 = sshll.u32 [#allocation14], 4
      %s125 = int_to_ptr.vmem [resolvable:$true] %s124
      %130 = dma.hbm_to_vmem [thread:$0]  %s9, 2048, %s125, [#allocation15], 128, 128, 8
    $region41: #{_gatdec_forward.1} parent=1 // pred_fallthru
      _
    // Predicated region
    $region42: #{_gatdec_forward.1} parent=1 // pred_check
      _
    $region43: #{_gatdec_forward.1} parent=1 // pred_check_branch
      %132 = sbr.rel (0) target = $region45
    $region44: #{_gatdec_forward.1} parent=1 // pred_region
      _
    $region45: #{_gatdec_forward.1} parent=1 // pred_fallthru
      _
    // Predicated region
    $region46: #{_gatdec_forward.1} parent=1 // pred_check
      _
    $region47: #{_gatdec_forward.1} parent=1 // pred_check_branch
      %134 = sbr.rel (0) target = $region49
    $region48: #{_gatdec_forward.1} parent=1 // pred_region
      %s136 = ssub.s32 2048, 2048
      %137 = vsyncadd [#allocation15], %s136
      %s138 = sshll.u32 [#allocation16], 4
      %s139 = int_to_ptr.vmem [resolvable:$true] %s138
      %144 = dma.hbm_to_vmem [thread:$0]  %s11, 2048, %s139, [#allocation15], 128, 128, 8
    $region49: #{_gatdec_forward.1} parent=1 // pred_fallthru
      _
    // Predicated region
    $region50: #{_gatdec_forward.1} parent=1 // pred_check
      _
    $region51: #{_gatdec_forward.1} parent=1 // pred_check_branch
      %146 = sbr.rel (0) target = $region53
    $region52: #{_gatdec_forward.1} parent=1 // pred_region
      _
    $region53: #{_gatdec_forward.1} parent=1 // pred_fallthru
      _
    // Predicated region
    $region54: #{_gatdec_forward.1} parent=1 // pred_check
      _
    $region55: #{_gatdec_forward.1} parent=1 // pred_check_branch
      %148 = sbr.rel (0) target = $region57
    $region56: #{_gatdec_forward.1} parent=1 // pred_region
      %s150 = ssub.s32 2048, 2048
      %151 = vsyncadd [#allocation18], %s150
      %s152 = sshll.u32 [#allocation17], 4
      %s153 = int_to_ptr.vmem [resolvable:$true] %s152
      %158 = dma.hbm_to_vmem [thread:$0]  %s13, 2048, %s153, [#allocation18], 128, 128, 8
    $region57: #{_gatdec_forward.1} parent=1 // pred_fallthru
      _
    // Predicated region
    $region58: #{_gatdec_forward.1} parent=1 // pred_check
      _
    $region59: #{_gatdec_forward.1} parent=1 // pred_check_branch
      %160 = sbr.rel (0) target = $region61
    $region60: #{_gatdec_forward.1} parent=1 // pred_region
      %s162 = ssub.s32 2048, 2048
      %163 = vsyncadd [#allocation18], %s162
      %s164 = sshll.u32 [#allocation19], 4
      %s165 = int_to_ptr.vmem [resolvable:$true] %s164
      %170 = dma.hbm_to_vmem [thread:$0]  %s14, 2048, %s165, [#allocation18], 128, 128, 8
    $region61: #{_gatdec_forward.1} parent=1 // pred_fallthru
      _
    // Predicated region
    $region62: #{_gatdec_forward.1} parent=1 // pred_check
      _
    $region63: #{_gatdec_forward.1} parent=1 // pred_check_branch
      %172 = sbr.rel (0) target = $region65
    $region64: #{_gatdec_forward.1} parent=1 // pred_region
      _
    $region65: #{_gatdec_forward.1} parent=1 // pred_fallthru
      _
    // Predicated region
    $region66: #{_gatdec_forward.1} parent=1 // pred_check
      _
    $region67: #{_gatdec_forward.1} parent=1 // pred_check_branch
      %174 = sbr.rel (0) target = $region69
    $region68: #{_gatdec_forward.1} parent=1 // pred_region
      %s176 = ssub.s32 2048, 2048
      %177 = vsyncadd [#allocation21], %s176
      %s178 = sshll.u32 [#allocation20], 4
      %s179 = int_to_ptr.vmem [resolvable:$true] %s178
      %184 = dma.hbm_to_vmem [thread:$0]  %s16, 2048, %s179, [#allocation21], 128, 128, 8
    $region69: #{_gatdec_forward.1} parent=1 // pred_fallthru
      _
    // Predicated region
    $region70: #{_gatdec_forward.1} parent=1 // pred_check
      _
    $region71: #{_gatdec_forward.1} parent=1 // pred_check_branch
      %186 = sbr.rel (0) target = $region73
    $region72: #{_gatdec_forward.1} parent=1 // pred_region
      _
    $region73: #{_gatdec_forward.1} parent=1 // pred_fallthru
      _
    // Predicated region
    $region74: #{_gatdec_forward.1} parent=1 // pred_check
      _
    $region75: #{_gatdec_forward.1} parent=1 // pred_check_branch
      %188 = sbr.rel (0) target = $region77
    $region76: #{_gatdec_forward.1} parent=1 // pred_region
      %189 = dma.done [#allocation3], 256
    $region77: #{_gatdec_forward.1} parent=1 // pred_fallthru
      _
    // Predicated region
    $region78: #{_gatdec_forward.1} parent=1 // pred_check
      _
    $region79: #{_gatdec_forward.1} parent=1 // pred_check_branch
      %191 = sbr.rel (0) target = $region81
    $region80: #{_gatdec_forward.1} parent=1 // pred_region
      %192 = dma.done [#allocation6], 256
    $region81: #{_gatdec_forward.1} parent=1 // pred_fallthru
      _
    // Predicated region
    $region82: #{_gatdec_forward.1} parent=1 // pred_check
      _
    $region83: #{_gatdec_forward.1} parent=1 // pred_check_branch
      %194 = sbr.rel (0) target = $region85
    $region84: #{_gatdec_forward.1} parent=1 // pred_region
      %195 = dma.done [#allocation6], 256
    $region85: #{_gatdec_forward.1} parent=1 // pred_fallthru
      _
    // Predicated region
    $region86: #{_gatdec_forward.1} parent=1 // pred_check
      _
    $region87: #{_gatdec_forward.1} parent=1 // pred_check_branch
      %197 = sbr.rel (0) target = $region89
    $region88: #{_gatdec_forward.1} parent=1 // pred_region
      %198 = dma.done [#allocation9], 2048
    $region89: #{_gatdec_forward.1} parent=1 // pred_fallthru
      _
    // Predicated region
    $region90: #{_gatdec_forward.1} parent=1 // pred_check
      _
    $region91: #{_gatdec_forward.1} parent=1 // pred_check_branch
      %200 = sbr.rel (0) target = $region93
    $region92: #{_gatdec_forward.1} parent=1 // pred_region
      %201 = dma.done [#allocation9], 2048
    $region93: #{_gatdec_forward.1} parent=1 // pred_fallthru
      _
    // Predicated region
    $region94: #{_gatdec_forward.1} parent=1 // pred_check
      _
    $region95: #{_gatdec_forward.1} parent=1 // pred_check_branch
      %203 = sbr.rel (0) target = $region97
    $region96: #{_gatdec_forward.1} parent=1 // pred_region
      %204 = dma.done [#allocation12], 2048
    $region97: #{_gatdec_forward.1} parent=1 // pred_fallthru
      _
    // Predicated region
    $region98: #{_gatdec_forward.1} parent=1 // pred_check
      _
    $region99: #{_gatdec_forward.1} parent=1 // pred_check_branch
      %206 = sbr.rel (0) target = $region101
    $region100: #{_gatdec_forward.1} parent=1 // pred_region
      %207 = dma.done [#allocation12], 2048
    $region101: #{_gatdec_forward.1} parent=1 // pred_fallthru
      _
    // Predicated region
    $region102: #{_gatdec_forward.1} parent=1 // pred_check
      _
    $region103: #{_gatdec_forward.1} parent=1 // pred_check_branch
      %209 = sbr.rel (0) target = $region105
    $region104: #{_gatdec_forward.1} parent=1 // pred_region
      %210 = dma.done [#allocation15], 2048
    $region105: #{_gatdec_forward.1} parent=1 // pred_fallthru
      _
    // Predicated region
    $region106: #{_gatdec_forward.1} parent=1 // pred_check
      _
    $region107: #{_gatdec_forward.1} parent=1 // pred_check_branch
      %212 = sbr.rel (0) target = $region109
    $region108: #{_gatdec_forward.1} parent=1 // pred_region
      %213 = dma.done [#allocation15], 2048
    $region109: #{_gatdec_forward.1} parent=1 // pred_fallthru
      _
    // Predicated region
    $region110: #{_gatdec_forward.1} parent=1 // pred_check
      _
    $region111: #{_gatdec_forward.1} parent=1 // pred_check_branch
      %215 = sbr.rel (0) target = $region113
    $region112: #{_gatdec_forward.1} parent=1 // pred_region
      %216 = dma.done [#allocation18], 2048
    $region113: #{_gatdec_forward.1} parent=1 // pred_fallthru
      _
    // Predicated region
    $region114: #{_gatdec_forward.1} parent=1 // pred_check
      _
    $region115: #{_gatdec_forward.1} parent=1 // pred_check_branch
      %218 = sbr.rel (0) target = $region117
    $region116: #{_gatdec_forward.1} parent=1 // pred_region
      %219 = dma.done [#allocation18], 2048
    $region117: #{_gatdec_forward.1} parent=1 // pred_fallthru
      _
    // Predicated region
    $region118: #{_gatdec_forward.1} parent=1 // pred_check
      _
    $region119: #{_gatdec_forward.1} parent=1 // pred_check_branch
      %221 = sbr.rel (0) target = $region121
    $region120: #{_gatdec_forward.1} parent=1 // pred_region
      %222 = dma.done [#allocation21], 2048
    $region121: #{_gatdec_forward.1} parent=1 // pred_fallthru
      _
    %v223 = vld [vmem:[#allocation2] sm:$0xff]
    %v224 = vld [vmem:[#allocation2 + $0x8] sm:$0xff]
    %vm225 = vcmp.gt.f32.partialorder %v223, 0.0
    %vm226 = vcmp.gt.f32.partialorder %v224, 0.0
    %v227 = vld [vmem:[#allocation5] sm:$0xff]
    %v228 = vld [vmem:[#allocation5 + $0x8] sm:$0xff]
    %v229 = vld [vmem:[#allocation7] sm:$0xff]
    %v230 = vld [vmem:[#allocation7 + $0x8] sm:$0xff]
    %v231 = vlaneseq
    %v232 = vand.u32 %v231, 127
    %v233 = vld [vmem:[#allocation8] sm:$0xff]
    %v234 = vld [vmem:[#allocation8 + $0x8] sm:$0xff]
    %v235 = vld [vmem:[#allocation8 + $0x10] sm:$0xff]
    %v236 = vld [vmem:[#allocation8 + $0x18] sm:$0xff]
    %v237 = vld [vmem:[#allocation8 + $0x20] sm:$0xff]
    %v238 = vld [vmem:[#allocation8 + $0x28] sm:$0xff]
    %v239 = vld [vmem:[#allocation8 + $0x30] sm:$0xff]
    %v240 = vld [vmem:[#allocation8 + $0x38] sm:$0xff]
    %v241 = vld [vmem:[#allocation8 + $0x40] sm:$0xff]
    %v242 = vld [vmem:[#allocation8 + $0x48] sm:$0xff]
    %v243 = vld [vmem:[#allocation8 + $0x50] sm:$0xff]
    %v244 = vld [vmem:[#allocation8 + $0x58] sm:$0xff]
    %v245 = vld [vmem:[#allocation8 + $0x60] sm:$0xff]
    %v246 = vld [vmem:[#allocation8 + $0x68] sm:$0xff]
    %v247 = vld [vmem:[#allocation8 + $0x70] sm:$0xff]
    %v248 = vld [vmem:[#allocation8 + $0x78] sm:$0xff]
    %v249 = vld [vmem:[%s5] sm:$0xff]
    %v250 = vld [vmem:[#allocation11] sm:$0xff]
    %v251 = vld [vmem:[#allocation11 + $0x8] sm:$0xff]
    %v252 = vld [vmem:[#allocation11 + $0x10] sm:$0xff]
    %v253 = vld [vmem:[#allocation11 + $0x18] sm:$0xff]
    %v254 = vld [vmem:[#allocation11 + $0x20] sm:$0xff]
    %v255 = vld [vmem:[#allocation11 + $0x28] sm:$0xff]
    %v256 = vld [vmem:[#allocation11 + $0x30] sm:$0xff]
    %v257 = vld [vmem:[#allocation11 + $0x38] sm:$0xff]
    %v258 = vld [vmem:[#allocation11 + $0x40] sm:$0xff]
    %v259 = vld [vmem:[#allocation11 + $0x48] sm:$0xff]
    %v260 = vld [vmem:[#allocation11 + $0x50] sm:$0xff]
    %v261 = vld [vmem:[#allocation11 + $0x58] sm:$0xff]
    %v262 = vld [vmem:[#allocation11 + $0x60] sm:$0xff]
    %v263 = vld [vmem:[#allocation11 + $0x68] sm:$0xff]
    %v264 = vld [vmem:[#allocation11 + $0x70] sm:$0xff]
    %v265 = vld [vmem:[#allocation11 + $0x78] sm:$0xff]
    %v266 = vld [vmem:[%s7] sm:$0x1]
    %v267 = vld [vmem:[#allocation10] sm:$0xff]
    %v268 = vld [vmem:[#allocation10 + $0x8] sm:$0xff]
    %v269 = vld [vmem:[#allocation10 + $0x10] sm:$0xff]
    %v270 = vld [vmem:[#allocation10 + $0x18] sm:$0xff]
    %v271 = vld [vmem:[#allocation10 + $0x20] sm:$0xff]
    %v272 = vld [vmem:[#allocation10 + $0x28] sm:$0xff]
    %v273 = vld [vmem:[#allocation10 + $0x30] sm:$0xff]
    %v274 = vld [vmem:[#allocation10 + $0x38] sm:$0xff]
    %v275 = vld [vmem:[#allocation10 + $0x40] sm:$0xff]
    %v276 = vld [vmem:[#allocation10 + $0x48] sm:$0xff]
    %v277 = vld [vmem:[#allocation10 + $0x50] sm:$0xff]
    %v278 = vld [vmem:[#allocation10 + $0x58] sm:$0xff]
    %v279 = vld [vmem:[#allocation10 + $0x60] sm:$0xff]
    %v280 = vld [vmem:[#allocation10 + $0x68] sm:$0xff]
    %v281 = vld [vmem:[#allocation10 + $0x70] sm:$0xff]
    %v282 = vld [vmem:[#allocation10 + $0x78] sm:$0xff]
    %283 = vmatprep.subr.mxu0 0.0
    %284 = vmatpush1.msra.mxu0 %v267
    %285 = vmatprep.subr.mxu0 0.0
    %286 = vmatpush1.msra.mxu0 %v268
    %287 = vmatprep.subr.mxu0 0.0
    %288 = vmatpush1.msra.mxu0 %v269
    %289 = vmatprep.subr.mxu0 0.0
    %290 = vmatpush1.msra.mxu0 %v270
    %291 = vmatprep.subr.mxu0 0.0
    %292 = vmatpush1.msra.mxu0 %v271
    %293 = vmatprep.subr.mxu0 0.0
    %294 = vmatpush1.msra.mxu0 %v272
    %295 = vmatprep.subr.mxu0 0.0
    %296 = vmatpush1.msra.mxu0 %v273
    %297 = vmatprep.subr.mxu0 0.0
    %298 = vmatpush1.msra.mxu0 %v274
    %299 = vmatprep.subr.mxu0 0.0
    %300 = vmatpush1.msra.mxu0 %v275
    %301 = vmatprep.subr.mxu0 0.0
    %302 = vmatpush1.msra.mxu0 %v276
    %303 = vmatprep.subr.mxu0 0.0
    %304 = vmatpush1.msra.mxu0 %v277
    %305 = vmatprep.subr.mxu0 0.0
    %306 = vmatpush1.msra.mxu0 %v278
    %307 = vmatprep.subr.mxu0 0.0
    %308 = vmatpush1.msra.mxu0 %v279
    %309 = vmatprep.subr.mxu0 0.0
    %310 = vmatpush1.msra.mxu0 %v280
    %311 = vmatprep.subr.mxu0 0.0
    %312 = vmatpush1.msra.mxu0 %v281
    %313 = vmatprep.subr.mxu0 0.0
    %314 = vmatpush1.msra.mxu0 %v282
    %315 = vmatprep.subr.mxu0 0.0
    %316 = vmatpush1.msra.mxu0 0.0
    %317 = vmatprep.subr.mxu0 0.0
    %318 = vmatpush1.msra.mxu0 0.0
    %319 = vmatprep.subr.mxu0 0.0
    %320 = vmatpush1.msra.mxu0 0.0
    %321 = vmatprep.subr.mxu0 0.0
    %322 = vmatpush1.msra.mxu0 0.0
    %323 = vmatprep.subr.mxu0 0.0
    %324 = vmatpush1.msra.mxu0 0.0
    %325 = vmatprep.subr.mxu0 0.0
    %326 = vmatpush1.msra.mxu0 0.0
    %327 = vmatprep.subr.mxu0 0.0
    %328 = vmatpush1.msra.mxu0 0.0
    %329 = vmatprep.subr.mxu0 0.0
    %330 = vmatpush1.msra.mxu0 0.0
    %331 = vmatprep.subr.mxu0 0.0
    %332 = vmatpush1.msra.mxu0 0.0
    %333 = vmatprep.subr.mxu0 0.0
    %334 = vmatpush1.msra.mxu0 0.0
    %335 = vmatprep.subr.mxu0 0.0
    %336 = vmatpush1.msra.mxu0 0.0
    %337 = vmatprep.subr.mxu0 0.0
    %338 = vmatpush1.msra.mxu0 0.0
    %339 = vmatprep.subr.mxu0 0.0
    %340 = vmatpush1.msra.mxu0 0.0
    %341 = vmatprep.subr.mxu0 0.0
    %342 = vmatpush1.msra.mxu0 0.0
    %343 = vmatprep.subr.mxu0 0.0
    %344 = vmatpush1.msra.mxu0 0.0
    %345 = vmatprep.subr.mxu0 0.0
    %346 = vmatpush1.msra.mxu0 0.0
    %347 = vmatprep.mubr.f32.mxu0 0.0
    %348 = vmatmul.mubr.f32.gmra.mrb[0].mxu0 %v229
    %v349 = vpop.f32.mrb[0].mxu0
    %v350 = vadd.f32 0.0, %v349
    %v351 = vpop.f32.mrb[0].mxu0
    %352 = vmatprep.mubr.f32.mxu0 0.0
    %353 = vmatmul.mubr.f32.gmra.mrb[0].mxu0 %v230
    %v354 = vpop.f32.mrb[0].mxu0
    %v355 = vadd.f32 0.0, %v354
    %v356 = vpop.f32.mrb[0].mxu0
    %357 = vdwg.mxu0
    %358 = vmatprep.subr.mxu0 0.0
    %359 = vmatpush1.msra.mxu0 %v233
    %360 = vmatprep.subr.mxu0 0.0
    %361 = vmatpush1.msra.mxu0 %v234
    %362 = vmatprep.subr.mxu0 0.0
    %363 = vmatpush1.msra.mxu0 %v235
    %364 = vmatprep.subr.mxu0 0.0
    %365 = vmatpush1.msra.mxu0 %v236
    %366 = vmatprep.subr.mxu0 0.0
    %367 = vmatpush1.msra.mxu0 %v237
    %368 = vmatprep.subr.mxu0 0.0
    %369 = vmatpush1.msra.mxu0 %v238
    %370 = vmatprep.subr.mxu0 0.0
    %371 = vmatpush1.msra.mxu0 %v239
    %372 = vmatprep.subr.mxu0 0.0
    %373 = vmatpush1.msra.mxu0 %v240
    %374 = vmatprep.subr.mxu0 0.0
    %375 = vmatpush1.msra.mxu0 %v241
    %376 = vmatprep.subr.mxu0 0.0
    %377 = vmatpush1.msra.mxu0 %v242
    %378 = vmatprep.subr.mxu0 0.0
    %379 = vmatpush1.msra.mxu0 %v243
    %380 = vmatprep.subr.mxu0 0.0
    %381 = vmatpush1.msra.mxu0 %v244
    %382 = vmatprep.subr.mxu0 0.0
    %383 = vmatpush1.msra.mxu0 %v245
    %384 = vmatprep.subr.mxu0 0.0
    %385 = vmatpush1.msra.mxu0 %v246
    %386 = vmatprep.subr.mxu0 0.0
    %387 = vmatpush1.msra.mxu0 %v247
    %388 = vmatprep.subr.mxu0 0.0
    %389 = vmatpush1.msra.mxu0 %v248
    %390 = vmatprep.subr.mxu0 0.0
    %391 = vmatpush1.msra.mxu0 0.0
    %392 = vmatprep.subr.mxu0 0.0
    %393 = vmatpush1.msra.mxu0 0.0
    %394 = vmatprep.subr.mxu0 0.0
    %395 = vmatpush1.msra.mxu0 0.0
    %396 = vmatprep.subr.mxu0 0.0
    %397 = vmatpush1.msra.mxu0 0.0
    %398 = vmatprep.subr.mxu0 0.0
    %399 = vmatpush1.msra.mxu0 0.0
    %400 = vmatprep.subr.mxu0 0.0
    %401 = vmatpush1.msra.mxu0 0.0
    %402 = vmatprep.subr.mxu0 0.0
    %403 = vmatpush1.msra.mxu0 0.0
    %404 = vmatprep.subr.mxu0 0.0
    %405 = vmatpush1.msra.mxu0 0.0
    %406 = vmatprep.subr.mxu0 0.0
    %407 = vmatpush1.msra.mxu0 0.0
    %408 = vmatprep.subr.mxu0 0.0
    %409 = vmatpush1.msra.mxu0 0.0
    %410 = vmatprep.subr.mxu0 0.0
    %411 = vmatpush1.msra.mxu0 0.0
    %412 = vmatprep.subr.mxu0 0.0
    %413 = vmatpush1.msra.mxu0 0.0
    %414 = vmatprep.subr.mxu0 0.0
    %415 = vmatpush1.msra.mxu0 0.0
    %416 = vmatprep.subr.mxu0 0.0
    %417 = vmatpush1.msra.mxu0 0.0
    %418 = vmatprep.subr.mxu0 0.0
    %419 = vmatpush1.msra.mxu0 0.0
    %420 = vmatprep.subr.mxu0 0.0
    %421 = vmatpush1.msra.mxu0 0.0
    %422 = vmatprep.mubr.f32.mxu0 0.0
    %423 = vmatmul.mubr.f32.gmra.mrb[0].mxu0 %v227
    %v424 = vpop.f32.mrb[0].mxu0
    %v425 = vadd.f32 %v350, %v424
    %v426 = vpop.f32.mrb[0].mxu0
    %427 = vmatprep.mubr.f32.mxu0 0.0
    %428 = vmatmul.mubr.f32.gmra.mrb[0].mxu0 %v228
    %v429 = vpop.f32.mrb[0].mxu0
    %v430 = vadd.f32 %v355, %v429
    %v431 = vpop.f32.mrb[0].mxu0
    %432 = vdwg.mxu0
    %433 = vmatprep.subr.mxu0 0.0
    %434 = vmatpush1.xpose.msra.mxu0 %v425
    %435 = vmatprep.subr.mxu0 0.0
    %436 = vmatpush1.xpose.msra.mxu0 %v430
    %437 = vmatprep.subr.mxu0 0.0
    %438 = vmatpush1.xpose.msra.mxu0 0.0
    %439 = vmatprep.subr.mxu0 0.0
    %440 = vmatpush1.xpose.msra.mxu0 0.0
    %441 = vmatprep.subr.mxu0 0.0
    %442 = vmatpush1.xpose.msra.mxu0 0.0
    %443 = vmatprep.subr.mxu0 0.0
    %444 = vmatpush1.xpose.msra.mxu0 0.0
    %445 = vmatprep.subr.mxu0 0.0
    %446 = vmatpush1.xpose.msra.mxu0 0.0
    %447 = vmatprep.subr.mxu0 0.0
    %448 = vmatpush1.xpose.msra.mxu0 0.0
    %449 = vmatprep.subr.mxu0 0.0
    %450 = vmatpush1.xpose.msra.mxu0 0.0
    %451 = vmatprep.subr.mxu0 0.0
    %452 = vmatpush1.xpose.msra.mxu0 0.0
    %453 = vmatprep.subr.mxu0 0.0
    %454 = vmatpush1.xpose.msra.mxu0 0.0
    %455 = vmatprep.subr.mxu0 0.0
    %456 = vmatpush1.xpose.msra.mxu0 0.0
    %457 = vmatprep.subr.mxu0 0.0
    %458 = vmatpush1.xpose.msra.mxu0 0.0
    %459 = vmatprep.subr.mxu0 0.0
    %460 = vmatpush1.xpose.msra.mxu0 0.0
    %461 = vmatprep.subr.mxu0 0.0
    %462 = vmatpush1.xpose.msra.mxu0 0.0
    %463 = vmatprep.subr.mxu0 0.0
    %464 = vmatpush1.xpose.msra.mxu0 0.0
    %465 = vmatprep.subr.mxu0 0.0
    %466 = vmatpush1.xpose.msra.mxu0 0.0
    %467 = vmatprep.subr.mxu0 0.0
    %468 = vmatpush1.xpose.msra.mxu0 0.0
    %469 = vmatprep.subr.mxu0 0.0
    %470 = vmatpush1.xpose.msra.mxu0 0.0
    %471 = vmatprep.subr.mxu0 0.0
    %472 = vmatpush1.xpose.msra.mxu0 0.0
    %473 = vmatprep.subr.mxu0 0.0
    %474 = vmatpush1.xpose.msra.mxu0 0.0
    %475 = vmatprep.subr.mxu0 0.0
    %476 = vmatpush1.xpose.msra.mxu0 0.0
    %477 = vmatprep.subr.mxu0 0.0
    %478 = vmatpush1.xpose.msra.mxu0 0.0
    %479 = vmatprep.subr.mxu0 0.0
    %480 = vmatpush1.xpose.msra.mxu0 0.0
    %481 = vmatprep.subr.mxu0 0.0
    %482 = vmatpush1.xpose.msra.mxu0 0.0
    %483 = vmatprep.subr.mxu0 0.0
    %484 = vmatpush1.xpose.msra.mxu0 0.0
    %485 = vmatprep.subr.mxu0 0.0
    %486 = vmatpush1.xpose.msra.mxu0 0.0
    %487 = vmatprep.subr.mxu0 0.0
    %488 = vmatpush1.xpose.msra.mxu0 0.0
    %489 = vmatprep.subr.mxu0 0.0
    %490 = vmatpush1.xpose.msra.mxu0 0.0
    %491 = vmatprep.subr.mxu0 0.0
    %492 = vmatpush1.xpose.msra.mxu0 0.0
    %493 = vmatprep.subr.mxu0 0.0
    %494 = vmatpush1.xpose.msra.mxu0 0.0
    %495 = vmatprep.subr.mxu0 0.0
    %496 = vmatpush1.xpose.msra.mxu0 0.0
    %497 = vmatprep.mubr.f32.mxu0 0.0
    %498 = vmatmul.mubr.f32.gmra.mrb[0].mxu0 %v249
    %v499 = vpop.f32.mrb[0].mxu0
    %v500 = vadd.f32 0.0, %v499
    %v501 = vpop.f32.mrb[0].mxu0
    %502 = vdwg.mxu0
    %503 = vmatprep.subr.mxu0 0.0
    %504 = vmatpush1.msra.mxu0 %v250
    %505 = vmatprep.subr.mxu0 0.0
    %506 = vmatpush1.msra.mxu0 %v251
    %507 = vmatprep.subr.mxu0 0.0
    %508 = vmatpush1.msra.mxu0 %v252
    %509 = vmatprep.subr.mxu0 0.0
    %510 = vmatpush1.msra.mxu0 %v253
    %511 = vmatprep.subr.mxu0 0.0
    %512 = vmatpush1.msra.mxu0 %v254
    %513 = vmatprep.subr.mxu0 0.0
    %514 = vmatpush1.msra.mxu0 %v255
    %515 = vmatprep.subr.mxu0 0.0
    %516 = vmatpush1.msra.mxu0 %v256
    %517 = vmatprep.subr.mxu0 0.0
    %518 = vmatpush1.msra.mxu0 %v257
    %519 = vmatprep.subr.mxu0 0.0
    %520 = vmatpush1.msra.mxu0 %v258
    %521 = vmatprep.subr.mxu0 0.0
    %522 = vmatpush1.msra.mxu0 %v259
    %523 = vmatprep.subr.mxu0 0.0
    %524 = vmatpush1.msra.mxu0 %v260
    %525 = vmatprep.subr.mxu0 0.0
    %526 = vmatpush1.msra.mxu0 %v261
    %527 = vmatprep.subr.mxu0 0.0
    %528 = vmatpush1.msra.mxu0 %v262
    %529 = vmatprep.subr.mxu0 0.0
    %530 = vmatpush1.msra.mxu0 %v263
    %531 = vmatprep.subr.mxu0 0.0
    %532 = vmatpush1.msra.mxu0 %v264
    %533 = vmatprep.subr.mxu0 0.0
    %534 = vmatpush1.msra.mxu0 %v265
    %535 = vmatprep.subr.mxu0 0.0
    %536 = vmatpush1.msra.mxu0 0.0
    %537 = vmatprep.subr.mxu0 0.0
    %538 = vmatpush1.msra.mxu0 0.0
    %539 = vmatprep.subr.mxu0 0.0
    %540 = vmatpush1.msra.mxu0 0.0
    %541 = vmatprep.subr.mxu0 0.0
    %542 = vmatpush1.msra.mxu0 0.0
    %543 = vmatprep.subr.mxu0 0.0
    %544 = vmatpush1.msra.mxu0 0.0
    %545 = vmatprep.subr.mxu0 0.0
    %546 = vmatpush1.msra.mxu0 0.0
    %547 = vmatprep.subr.mxu0 0.0
    %548 = vmatpush1.msra.mxu0 0.0
    %549 = vmatprep.subr.mxu0 0.0
    %550 = vmatpush1.msra.mxu0 0.0
    %551 = vmatprep.subr.mxu0 0.0
    %552 = vmatpush1.msra.mxu0 0.0
    %553 = vmatprep.subr.mxu0 0.0
    %554 = vmatpush1.msra.mxu0 0.0
    %555 = vmatprep.subr.mxu0 0.0
    %556 = vmatpush1.msra.mxu0 0.0
    %557 = vmatprep.subr.mxu0 0.0
    %558 = vmatpush1.msra.mxu0 0.0
    %559 = vmatprep.subr.mxu0 0.0
    %560 = vmatpush1.msra.mxu0 0.0
    %561 = vmatprep.subr.mxu0 0.0
    %562 = vmatpush1.msra.mxu0 0.0
    %563 = vmatprep.subr.mxu0 0.0
    %564 = vmatpush1.msra.mxu0 0.0
    %565 = vmatprep.subr.mxu0 0.0
    %566 = vmatpush1.msra.mxu0 0.0
    %567 = vmatprep.mubr.f32.mxu0 0.0
    %568 = vmatmul.mubr.f32.gmra.mrb[0].mxu0 %v425
    %v569 = vpop.f32.mrb[0].mxu0
    %v570 = vadd.f32 0.0, %v569
    %v571 = vpop.f32.mrb[0].mxu0
    %572 = vmatprep.mubr.f32.mxu0 0.0
    %573 = vmatmul.mubr.f32.gmra.mrb[0].mxu0 %v430
    %v574 = vpop.f32.mrb[0].mxu0
    %v575 = vadd.f32 0.0, %v574
    %v576 = vpop.f32.mrb[0].mxu0
    %577 = vdwg.mxu0
    %579 = vset.pattern.permute.xlu0 0
    %580 = vperm.xlu0 %579, %v570
    %v581 = vpop.permute.xlu0 %580
    %584 = vset.pattern.permute.xlu0 0
    %585 = vperm.xlu0 %584, %v575
    %v586 = vpop.permute.xlu0 %585
    %v588 = vlaneseq
    %v589 = vshrl.u32 %v588, 7
    %v590 = vsub.s32 0, %v589
    %v591 = vrot.slane %v500, %v590
    %v592 = vadd.f32 %v581, %v591
    %v593 = vadd.f32 %v586, %v591
    %vm594 = vcmp.ge.f32.partialorder %v592, 0.0
    %vm595 = vcmp.ge.f32.partialorder %v593, 0.0
    %v596 = vmul.f32 %v592, 0.2
    %v597 = vmul.f32 %v593, 0.2
    %v598 = vsel %vm594, %v592, %v596
    %v599 = vsel %vm595, %v593, %v597
    %v600 = vsel %vm225, %v598, -1e+09
    %v601 = vsel %vm226, %v599, -1e+09
    %vm602 = vcmask 130048
    %v603 = vsel %vm602, %v600, -inf
    %604 = vmax.xlane.f32.xlu0 %v603
    %v605 = vpop.xlane.xlu0 %604
    %v606 = vsel %vm602, %v601, -inf
    %607 = vmax.xlane.f32.xlu0 %v606
    %v608 = vpop.xlane.xlu0 %607
    %v609 = vsub.f32 %v600, %v605
    %v610 = vsub.f32 %v601, %v608
    %v611 = vmul.f32 %v609, 1.442695
    %v612 = vpow.pop %v611
    %v613 = vmul.f32 %v610, 1.442695
    %v614 = vpow.pop %v613
    %v615 = vsel %vm602, %v612, 0.0
    %616 = vadd.xlane.f32.xlu0 %v615
    %v617 = vpop.xlane.xlu0 %616
    %v618 = vsel %vm602, %v614, 0.0
    %619 = vadd.xlane.f32.xlu0 %v618
    %v620 = vpop.xlane.xlu0 %619
    %v621 = vrcp.pop %v617
    %v622 = vrcp.pop %v620
    %v623 = vmul.f32 %v612, %v621
    %v624 = vmul.f32 %v614, %v622
    %v626 = vsel %vm602, %v623, 0
    %v629 = vsel %vm602, %v624, 0
    %631 = vmatprep.subr.mxu0 0.0
    %632 = vmatpush1.msra.mxu0 %v425
    %633 = vmatprep.subr.mxu0 0.0
    %634 = vmatpush1.msra.mxu0 %v430
    %635 = vmatprep.subr.mxu0 0.0
    %636 = vmatpush1.msra.mxu0 0.0
    %637 = vmatprep.subr.mxu0 0.0
    %638 = vmatpush1.msra.mxu0 0.0
    %639 = vmatprep.subr.mxu0 0.0
    %640 = vmatpush1.msra.mxu0 0.0
    %641 = vmatprep.subr.mxu0 0.0
    %642 = vmatpush1.msra.mxu0 0.0
    %643 = vmatprep.subr.mxu0 0.0
    %644 = vmatpush1.msra.mxu0 0.0
    %645 = vmatprep.subr.mxu0 0.0
    %646 = vmatpush1.msra.mxu0 0.0
    %647 = vmatprep.subr.mxu0 0.0
    %648 = vmatpush1.msra.mxu0 0.0
    %649 = vmatprep.subr.mxu0 0.0
    %650 = vmatpush1.msra.mxu0 0.0
    %651 = vmatprep.subr.mxu0 0.0
    %652 = vmatpush1.msra.mxu0 0.0
    %653 = vmatprep.subr.mxu0 0.0
    %654 = vmatpush1.msra.mxu0 0.0
    %655 = vmatprep.subr.mxu0 0.0
    %656 = vmatpush1.msra.mxu0 0.0
    %657 = vmatprep.subr.mxu0 0.0
    %658 = vmatpush1.msra.mxu0 0.0
    %659 = vmatprep.subr.mxu0 0.0
    %660 = vmatpush1.msra.mxu0 0.0
    %661 = vmatprep.subr.mxu0 0.0
    %662 = vmatpush1.msra.mxu0 0.0
    %663 = vmatprep.subr.mxu0 0.0
    %664 = vmatpush1.msra.mxu0 0.0
    %665 = vmatprep.subr.mxu0 0.0
    %666 = vmatpush1.msra.mxu0 0.0
    %667 = vmatprep.subr.mxu0 0.0
    %668 = vmatpush1.msra.mxu0 0.0
    %669 = vmatprep.subr.mxu0 0.0
    %670 = vmatpush1.msra.mxu0 0.0
    %671 = vmatprep.subr.mxu0 0.0
    %672 = vmatpush1.msra.mxu0 0.0
    %673 = vmatprep.subr.mxu0 0.0
    %674 = vmatpush1.msra.mxu0 0.0
    %675 = vmatprep.subr.mxu0 0.0
    %676 = vmatpush1.msra.mxu0 0.0
    %677 = vmatprep.subr.mxu0 0.0
    %678 = vmatpush1.msra.mxu0 0.0
    %679 = vmatprep.subr.mxu0 0.0
    %680 = vmatpush1.msra.mxu0 0.0
    %681 = vmatprep.subr.mxu0 0.0
    %682 = vmatpush1.msra.mxu0 0.0
    %683 = vmatprep.subr.mxu0 0.0
    %684 = vmatpush1.msra.mxu0 0.0
    %685 = vmatprep.subr.mxu0 0.0
    %686 = vmatpush1.msra.mxu0 0.0
    %687 = vmatprep.subr.mxu0 0.0
    %688 = vmatpush1.msra.mxu0 0.0
    %689 = vmatprep.subr.mxu0 0.0
    %690 = vmatpush1.msra.mxu0 0.0
    %691 = vmatprep.subr.mxu0 0.0
    %692 = vmatpush1.msra.mxu0 0.0
    %693 = vmatprep.subr.mxu0 0.0
    %694 = vmatpush1.msra.mxu0 0.0
    %695 = vmatprep.mubr.f32.mxu0 0.0
    %696 = vmatmul.mubr.f32.gmra.mrb[0].mxu0 %v626
    %v697 = vpop.f32.mrb[0].mxu0
    %v698 = vadd.f32 0.0, %v697
    %v699 = vpop.f32.mrb[0].mxu0
    %700 = vmatprep.mubr.f32.mxu0 0.0
    %701 = vmatmul.mubr.f32.gmra.mrb[0].mxu0 %v629
    %v702 = vpop.f32.mrb[0].mxu0
    %v703 = vadd.f32 0.0, %v702
    %v704 = vpop.f32.mrb[0].mxu0
    %705 = vdwg.mxu0
    %vm706 = vcmp.ge.s32.totalorder %v232, 0
    %vm707 = vcmp.lt.s32.totalorder %v232, 32
    %vm708 = vmand %vm706, %vm707
    %v709 = vsel %vm708, %v698, 0.0
    %v710 = vsel %vm708, %v703, 0.0
    %v711 = vadd.f32 %v709, 0.0
    %v712 = vadd.f32 %v710, 0.0
    %713 = vset.pattern.permute.xlu0 1
    %714 = vperm.xlu0 %713, %v570
    %v715 = vpop.permute.xlu0 %714
    %717 = vset.pattern.permute.xlu0 1
    %718 = vperm.xlu0 %717, %v575
    %v719 = vpop.permute.xlu0 %718
    %v721 = vlaneseq
    %v722 = vshrl.u32 %v721, 7
    %v723 = vsub.s32 1, %v722
    %v724 = vrot.slane %v500, %v723
    %v725 = vadd.f32 %v715, %v724
    %v726 = vadd.f32 %v719, %v724
    %vm727 = vcmp.ge.f32.partialorder %v725, 0.0
    %vm728 = vcmp.ge.f32.partialorder %v726, 0.0
    %v729 = vmul.f32 %v725, 0.2
    %v730 = vmul.f32 %v726, 0.2
    %v731 = vsel %vm727, %v725, %v729
    %v732 = vsel %vm728, %v726, %v730
    %v733 = vsel %vm225, %v731, -1e+09
    %v734 = vsel %vm226, %v732, -1e+09
    %v735 = vsel %vm602, %v733, -inf
    %736 = vmax.xlane.f32.xlu0 %v735
    %v737 = vpop.xlane.xlu0 %736
    %v738 = vsel %vm602, %v734, -inf
    %739 = vmax.xlane.f32.xlu0 %v738
    %v740 = vpop.xlane.xlu0 %739
    %v741 = vsub.f32 %v733, %v737
    %v742 = vsub.f32 %v734, %v740
    %v743 = vmul.f32 %v741, 1.442695
    %v744 = vpow.pop %v743
    %v745 = vmul.f32 %v742, 1.442695
    %v746 = vpow.pop %v745
    %v747 = vsel %vm602, %v744, 0.0
    %748 = vadd.xlane.f32.xlu0 %v747
    %v749 = vpop.xlane.xlu0 %748
    %v750 = vsel %vm602, %v746, 0.0
    %751 = vadd.xlane.f32.xlu0 %v750
    %v752 = vpop.xlane.xlu0 %751
    %v753 = vrcp.pop %v749
    %v754 = vrcp.pop %v752
    %v755 = vmul.f32 %v744, %v753
    %v756 = vmul.f32 %v746, %v754
    %v758 = vsel %vm602, %v755, 0
    %v761 = vsel %vm602, %v756, 0
    %763 = vmatprep.subr.mxu0 0.0
    %764 = vmatpush1.msra.mxu0 %v425
    %765 = vmatprep.subr.mxu0 0.0
    %766 = vmatpush1.msra.mxu0 %v430
    %767 = vmatprep.subr.mxu0 0.0
    %768 = vmatpush1.msra.mxu0 0.0
    %769 = vmatprep.subr.mxu0 0.0
    %770 = vmatpush1.msra.mxu0 0.0
    %771 = vmatprep.subr.mxu0 0.0
    %772 = vmatpush1.msra.mxu0 0.0
    %773 = vmatprep.subr.mxu0 0.0
    %774 = vmatpush1.msra.mxu0 0.0
    %775 = vmatprep.subr.mxu0 0.0
    %776 = vmatpush1.msra.mxu0 0.0
    %777 = vmatprep.subr.mxu0 0.0
    %778 = vmatpush1.msra.mxu0 0.0
    %779 = vmatprep.subr.mxu0 0.0
    %780 = vmatpush1.msra.mxu0 0.0
    %781 = vmatprep.subr.mxu0 0.0
    %782 = vmatpush1.msra.mxu0 0.0
    %783 = vmatprep.subr.mxu0 0.0
    %784 = vmatpush1.msra.mxu0 0.0
    %785 = vmatprep.subr.mxu0 0.0
    %786 = vmatpush1.msra.mxu0 0.0
    %787 = vmatprep.subr.mxu0 0.0
    %788 = vmatpush1.msra.mxu0 0.0
    %789 = vmatprep.subr.mxu0 0.0
    %790 = vmatpush1.msra.mxu0 0.0
    %791 = vmatprep.subr.mxu0 0.0
    %792 = vmatpush1.msra.mxu0 0.0
    %793 = vmatprep.subr.mxu0 0.0
    %794 = vmatpush1.msra.mxu0 0.0
    %795 = vmatprep.subr.mxu0 0.0
    %796 = vmatpush1.msra.mxu0 0.0
    %797 = vmatprep.subr.mxu0 0.0
    %798 = vmatpush1.msra.mxu0 0.0
    %799 = vmatprep.subr.mxu0 0.0
    %800 = vmatpush1.msra.mxu0 0.0
    %801 = vmatprep.subr.mxu0 0.0
    %802 = vmatpush1.msra.mxu0 0.0
    %803 = vmatprep.subr.mxu0 0.0
    %804 = vmatpush1.msra.mxu0 0.0
    %805 = vmatprep.subr.mxu0 0.0
    %806 = vmatpush1.msra.mxu0 0.0
    %807 = vmatprep.subr.mxu0 0.0
    %808 = vmatpush1.msra.mxu0 0.0
    %809 = vmatprep.subr.mxu0 0.0
    %810 = vmatpush1.msra.mxu0 0.0
    %811 = vmatprep.subr.mxu0 0.0
    %812 = vmatpush1.msra.mxu0 0.0
    %813 = vmatprep.subr.mxu0 0.0
    %814 = vmatpush1.msra.mxu0 0.0
    %815 = vmatprep.subr.mxu0 0.0
    %816 = vmatpush1.msra.mxu0 0.0
    %817 = vmatprep.subr.mxu0 0.0
    %818 = vmatpush1.msra.mxu0 0.0
    %819 = vmatprep.subr.mxu0 0.0
    %820 = vmatpush1.msra.mxu0 0.0
    %821 = vmatprep.subr.mxu0 0.0
    %822 = vmatpush1.msra.mxu0 0.0
    %823 = vmatprep.subr.mxu0 0.0
    %824 = vmatpush1.msra.mxu0 0.0
    %825 = vmatprep.subr.mxu0 0.0
    %826 = vmatpush1.msra.mxu0 0.0
    %827 = vmatprep.mubr.f32.mxu0 0.0
    %828 = vmatmul.mubr.f32.gmra.mrb[0].mxu0 %v758
    %v829 = vpop.f32.mrb[0].mxu0
    %v830 = vadd.f32 0.0, %v829
    %v831 = vpop.f32.mrb[0].mxu0
    %832 = vmatprep.mubr.f32.mxu0 0.0
    %833 = vmatmul.mubr.f32.gmra.mrb[0].mxu0 %v761
    %v834 = vpop.f32.mrb[0].mxu0
    %v835 = vadd.f32 0.0, %v834
    %v836 = vpop.f32.mrb[0].mxu0
    %837 = vdwg.mxu0
    %vm838 = vcmp.ge.s32.totalorder %v232, 32
    %vm839 = vcmp.lt.s32.totalorder %v232, 64
    %vm840 = vmand %vm838, %vm839
    %v841 = vsel %vm840, %v830, 0.0
    %v842 = vsel %vm840, %v835, 0.0
    %v843 = vadd.f32 %v711, %v841
    %v844 = vadd.f32 %v712, %v842
    %v846 = vlaneseq
    %v847 = vshrl.u32 %v846, 7
    %v848 = vsub.s32 0, %v847
    %v849 = vrot.slane %v266, %v848
    %v851 = vadd.f32 %v843, %v849
    %v852 = vadd.f32 %v844, %v849
    %v853 = vmax.f32 %v851, 0.0
    %v854 = vmax.f32 %v852, 0.0
    %v855 = vld [vmem:[#allocation13] sm:$0xff]
    %v856 = vld [vmem:[#allocation13 + $0x8] sm:$0xff]
    %v857 = vld [vmem:[#allocation13 + $0x10] sm:$0xff]
    %v858 = vld [vmem:[#allocation13 + $0x18] sm:$0xff]
    %v859 = vld [vmem:[#allocation13 + $0x20] sm:$0xff]
    %v860 = vld [vmem:[#allocation13 + $0x28] sm:$0xff]
    %v861 = vld [vmem:[#allocation13 + $0x30] sm:$0xff]
    %v862 = vld [vmem:[#allocation13 + $0x38] sm:$0xff]
    %v863 = vld [vmem:[#allocation13 + $0x40] sm:$0xff]
    %v864 = vld [vmem:[#allocation13 + $0x48] sm:$0xff]
    %v865 = vld [vmem:[#allocation13 + $0x50] sm:$0xff]
    %v866 = vld [vmem:[#allocation13 + $0x58] sm:$0xff]
    %v867 = vld [vmem:[#allocation13 + $0x60] sm:$0xff]
    %v868 = vld [vmem:[#allocation13 + $0x68] sm:$0xff]
    %v869 = vld [vmem:[#allocation13 + $0x70] sm:$0xff]
    %v870 = vld [vmem:[#allocation13 + $0x78] sm:$0xff]
    %v871 = vld [vmem:[%s10] sm:$0xff]
    %v872 = vld [vmem:[#allocation16] sm:$0xff]
    %v873 = vld [vmem:[#allocation16 + $0x8] sm:$0xff]
    %v874 = vld [vmem:[#allocation16 + $0x10] sm:$0xff]
    %v875 = vld [vmem:[#allocation16 + $0x18] sm:$0xff]
    %v876 = vld [vmem:[#allocation16 + $0x20] sm:$0xff]
    %v877 = vld [vmem:[#allocation16 + $0x28] sm:$0xff]
    %v878 = vld [vmem:[#allocation16 + $0x30] sm:$0xff]
    %v879 = vld [vmem:[#allocation16 + $0x38] sm:$0xff]
    %v880 = vld [vmem:[#allocation16 + $0x40] sm:$0xff]
    %v881 = vld [vmem:[#allocation16 + $0x48] sm:$0xff]
    %v882 = vld [vmem:[#allocation16 + $0x50] sm:$0xff]
    %v883 = vld [vmem:[#allocation16 + $0x58] sm:$0xff]
    %v884 = vld [vmem:[#allocation16 + $0x60] sm:$0xff]
    %v885 = vld [vmem:[#allocation16 + $0x68] sm:$0xff]
    %v886 = vld [vmem:[#allocation16 + $0x70] sm:$0xff]
    %v887 = vld [vmem:[#allocation16 + $0x78] sm:$0xff]
    %v888 = vld [vmem:[%s12] sm:$0x1]
    %v889 = vld [vmem:[#allocation14] sm:$0xff]
    %v890 = vld [vmem:[#allocation14 + $0x8] sm:$0xff]
    %v891 = vld [vmem:[#allocation14 + $0x10] sm:$0xff]
    %v892 = vld [vmem:[#allocation14 + $0x18] sm:$0xff]
    %v893 = vld [vmem:[#allocation14 + $0x20] sm:$0xff]
    %v894 = vld [vmem:[#allocation14 + $0x28] sm:$0xff]
    %v895 = vld [vmem:[#allocation14 + $0x30] sm:$0xff]
    %v896 = vld [vmem:[#allocation14 + $0x38] sm:$0xff]
    %v897 = vld [vmem:[#allocation14 + $0x40] sm:$0xff]
    %v898 = vld [vmem:[#allocation14 + $0x48] sm:$0xff]
    %v899 = vld [vmem:[#allocation14 + $0x50] sm:$0xff]
    %v900 = vld [vmem:[#allocation14 + $0x58] sm:$0xff]
    %v901 = vld [vmem:[#allocation14 + $0x60] sm:$0xff]
    %v902 = vld [vmem:[#allocation14 + $0x68] sm:$0xff]
    %v903 = vld [vmem:[#allocation14 + $0x70] sm:$0xff]
    %v904 = vld [vmem:[#allocation14 + $0x78] sm:$0xff]
    %905 = vmatprep.subr.mxu0 0.0
    %906 = vmatpush1.msra.mxu0 %v889
    %907 = vmatprep.subr.mxu0 0.0
    %908 = vmatpush1.msra.mxu0 %v890
    %909 = vmatprep.subr.mxu0 0.0
    %910 = vmatpush1.msra.mxu0 %v891
    %911 = vmatprep.subr.mxu0 0.0
    %912 = vmatpush1.msra.mxu0 %v892
    %913 = vmatprep.subr.mxu0 0.0
    %914 = vmatpush1.msra.mxu0 %v893
    %915 = vmatprep.subr.mxu0 0.0
    %916 = vmatpush1.msra.mxu0 %v894
    %917 = vmatprep.subr.mxu0 0.0
    %918 = vmatpush1.msra.mxu0 %v895
    %919 = vmatprep.subr.mxu0 0.0
    %920 = vmatpush1.msra.mxu0 %v896
    %921 = vmatprep.subr.mxu0 0.0
    %922 = vmatpush1.msra.mxu0 %v897
    %923 = vmatprep.subr.mxu0 0.0
    %924 = vmatpush1.msra.mxu0 %v898
    %925 = vmatprep.subr.mxu0 0.0
    %926 = vmatpush1.msra.mxu0 %v899
    %927 = vmatprep.subr.mxu0 0.0
    %928 = vmatpush1.msra.mxu0 %v900
    %929 = vmatprep.subr.mxu0 0.0
    %930 = vmatpush1.msra.mxu0 %v901
    %931 = vmatprep.subr.mxu0 0.0
    %932 = vmatpush1.msra.mxu0 %v902
    %933 = vmatprep.subr.mxu0 0.0
    %934 = vmatpush1.msra.mxu0 %v903
    %935 = vmatprep.subr.mxu0 0.0
    %936 = vmatpush1.msra.mxu0 %v904
    %937 = vmatprep.subr.mxu0 0.0
    %938 = vmatpush1.msra.mxu0 0.0
    %939 = vmatprep.subr.mxu0 0.0
    %940 = vmatpush1.msra.mxu0 0.0
    %941 = vmatprep.subr.mxu0 0.0
    %942 = vmatpush1.msra.mxu0 0.0
    %943 = vmatprep.subr.mxu0 0.0
    %944 = vmatpush1.msra.mxu0 0.0
    %945 = vmatprep.subr.mxu0 0.0
    %946 = vmatpush1.msra.mxu0 0.0
    %947 = vmatprep.subr.mxu0 0.0
    %948 = vmatpush1.msra.mxu0 0.0
    %949 = vmatprep.subr.mxu0 0.0
    %950 = vmatpush1.msra.mxu0 0.0
    %951 = vmatprep.subr.mxu0 0.0
    %952 = vmatpush1.msra.mxu0 0.0
    %953 = vmatprep.subr.mxu0 0.0
    %954 = vmatpush1.msra.mxu0 0.0
    %955 = vmatprep.subr.mxu0 0.0
    %956 = vmatpush1.msra.mxu0 0.0
    %957 = vmatprep.subr.mxu0 0.0
    %958 = vmatpush1.msra.mxu0 0.0
    %959 = vmatprep.subr.mxu0 0.0
    %960 = vmatpush1.msra.mxu0 0.0
    %961 = vmatprep.subr.mxu0 0.0
    %962 = vmatpush1.msra.mxu0 0.0
    %963 = vmatprep.subr.mxu0 0.0
    %964 = vmatpush1.msra.mxu0 0.0
    %965 = vmatprep.subr.mxu0 0.0
    %966 = vmatpush1.msra.mxu0 0.0
    %967 = vmatprep.subr.mxu0 0.0
    %968 = vmatpush1.msra.mxu0 0.0
    %969 = vmatprep.mubr.f32.mxu0 0.0
    %970 = vmatmul.mubr.f32.gmra.mrb[0].mxu0 %v229
    %v971 = vpop.f32.mrb[0].mxu0
    %v972 = vadd.f32 0.0, %v971
    %v973 = vpop.f32.mrb[0].mxu0
    %974 = vmatprep.mubr.f32.mxu0 0.0
    %975 = vmatmul.mubr.f32.gmra.mrb[0].mxu0 %v230
    %v976 = vpop.f32.mrb[0].mxu0
    %v977 = vadd.f32 0.0, %v976
    %v978 = vpop.f32.mrb[0].mxu0
    %979 = vdwg.mxu0
    %980 = vmatprep.subr.mxu0 0.0
    %981 = vmatpush1.msra.mxu0 %v855
    %982 = vmatprep.subr.mxu0 0.0
    %983 = vmatpush1.msra.mxu0 %v856
    %984 = vmatprep.subr.mxu0 0.0
    %985 = vmatpush1.msra.mxu0 %v857
    %986 = vmatprep.subr.mxu0 0.0
    %987 = vmatpush1.msra.mxu0 %v858
    %988 = vmatprep.subr.mxu0 0.0
    %989 = vmatpush1.msra.mxu0 %v859
    %990 = vmatprep.subr.mxu0 0.0
    %991 = vmatpush1.msra.mxu0 %v860
    %992 = vmatprep.subr.mxu0 0.0
    %993 = vmatpush1.msra.mxu0 %v861
    %994 = vmatprep.subr.mxu0 0.0
    %995 = vmatpush1.msra.mxu0 %v862
    %996 = vmatprep.subr.mxu0 0.0
    %997 = vmatpush1.msra.mxu0 %v863
    %998 = vmatprep.subr.mxu0 0.0
    %999 = vmatpush1.msra.mxu0 %v864
    %1000 = vmatprep.subr.mxu0 0.0
    %1001 = vmatpush1.msra.mxu0 %v865
    %1002 = vmatprep.subr.mxu0 0.0
    %1003 = vmatpush1.msra.mxu0 %v866
    %1004 = vmatprep.subr.mxu0 0.0
    %1005 = vmatpush1.msra.mxu0 %v867
    %1006 = vmatprep.subr.mxu0 0.0
    %1007 = vmatpush1.msra.mxu0 %v868
    %1008 = vmatprep.subr.mxu0 0.0
    %1009 = vmatpush1.msra.mxu0 %v869
    %1010 = vmatprep.subr.mxu0 0.0
    %1011 = vmatpush1.msra.mxu0 %v870
    %1012 = vmatprep.subr.mxu0 0.0
    %1013 = vmatpush1.msra.mxu0 0.0
    %1014 = vmatprep.subr.mxu0 0.0
    %1015 = vmatpush1.msra.mxu0 0.0
    %1016 = vmatprep.subr.mxu0 0.0
    %1017 = vmatpush1.msra.mxu0 0.0
    %1018 = vmatprep.subr.mxu0 0.0
    %1019 = vmatpush1.msra.mxu0 0.0
    %1020 = vmatprep.subr.mxu0 0.0
    %1021 = vmatpush1.msra.mxu0 0.0
    %1022 = vmatprep.subr.mxu0 0.0
    %1023 = vmatpush1.msra.mxu0 0.0
    %1024 = vmatprep.subr.mxu0 0.0
    %1025 = vmatpush1.msra.mxu0 0.0
    %1026 = vmatprep.subr.mxu0 0.0
    %1027 = vmatpush1.msra.mxu0 0.0
    %1028 = vmatprep.subr.mxu0 0.0
    %1029 = vmatpush1.msra.mxu0 0.0
    %1030 = vmatprep.subr.mxu0 0.0
    %1031 = vmatpush1.msra.mxu0 0.0
    %1032 = vmatprep.subr.mxu0 0.0
    %1033 = vmatpush1.msra.mxu0 0.0
    %1034 = vmatprep.subr.mxu0 0.0
    %1035 = vmatpush1.msra.mxu0 0.0
    %1036 = vmatprep.subr.mxu0 0.0
    %1037 = vmatpush1.msra.mxu0 0.0
    %1038 = vmatprep.subr.mxu0 0.0
    %1039 = vmatpush1.msra.mxu0 0.0
    %1040 = vmatprep.subr.mxu0 0.0
    %1041 = vmatpush1.msra.mxu0 0.0
    %1042 = vmatprep.subr.mxu0 0.0
    %1043 = vmatpush1.msra.mxu0 0.0
    %1044 = vmatprep.mubr.f32.mxu0 0.0
    %1045 = vmatmul.mubr.f32.gmra.mrb[0].mxu0 %v853
    %v1046 = vpop.f32.mrb[0].mxu0
    %v1047 = vadd.f32 %v972, %v1046
    %v1048 = vpop.f32.mrb[0].mxu0
    %1049 = vmatprep.mubr.f32.mxu0 0.0
    %1050 = vmatmul.mubr.f32.gmra.mrb[0].mxu0 %v854
    %v1051 = vpop.f32.mrb[0].mxu0
    %v1052 = vadd.f32 %v977, %v1051
    %v1053 = vpop.f32.mrb[0].mxu0
    %1054 = vdwg.mxu0
    %1055 = vmatprep.subr.mxu0 0.0
    %1056 = vmatpush1.xpose.msra.mxu0 %v1047
    %1057 = vmatprep.subr.mxu0 0.0
    %1058 = vmatpush1.xpose.msra.mxu0 %v1052
    %1059 = vmatprep.subr.mxu0 0.0
    %1060 = vmatpush1.xpose.msra.mxu0 0.0
    %1061 = vmatprep.subr.mxu0 0.0
    %1062 = vmatpush1.xpose.msra.mxu0 0.0
    %1063 = vmatprep.subr.mxu0 0.0
    %1064 = vmatpush1.xpose.msra.mxu0 0.0
    %1065 = vmatprep.subr.mxu0 0.0
    %1066 = vmatpush1.xpose.msra.mxu0 0.0
    %1067 = vmatprep.subr.mxu0 0.0
    %1068 = vmatpush1.xpose.msra.mxu0 0.0
    %1069 = vmatprep.subr.mxu0 0.0
    %1070 = vmatpush1.xpose.msra.mxu0 0.0
    %1071 = vmatprep.subr.mxu0 0.0
    %1072 = vmatpush1.xpose.msra.mxu0 0.0
    %1073 = vmatprep.subr.mxu0 0.0
    %1074 = vmatpush1.xpose.msra.mxu0 0.0
    %1075 = vmatprep.subr.mxu0 0.0
    %1076 = vmatpush1.xpose.msra.mxu0 0.0
    %1077 = vmatprep.subr.mxu0 0.0
    %1078 = vmatpush1.xpose.msra.mxu0 0.0
    %1079 = vmatprep.subr.mxu0 0.0
    %1080 = vmatpush1.xpose.msra.mxu0 0.0
    %1081 = vmatprep.subr.mxu0 0.0
    %1082 = vmatpush1.xpose.msra.mxu0 0.0
    %1083 = vmatprep.subr.mxu0 0.0
    %1084 = vmatpush1.xpose.msra.mxu0 0.0
    %1085 = vmatprep.subr.mxu0 0.0
    %1086 = vmatpush1.xpose.msra.mxu0 0.0
    %1087 = vmatprep.subr.mxu0 0.0
    %1088 = vmatpush1.xpose.msra.mxu0 0.0
    %1089 = vmatprep.subr.mxu0 0.0
    %1090 = vmatpush1.xpose.msra.mxu0 0.0
    %1091 = vmatprep.subr.mxu0 0.0
    %1092 = vmatpush1.xpose.msra.mxu0 0.0
    %1093 = vmatprep.subr.mxu0 0.0
    %1094 = vmatpush1.xpose.msra.mxu0 0.0
    %1095 = vmatprep.subr.mxu0 0.0
    %1096 = vmatpush1.xpose.msra.mxu0 0.0
    %1097 = vmatprep.subr.mxu0 0.0
    %1098 = vmatpush1.xpose.msra.mxu0 0.0
    %1099 = vmatprep.subr.mxu0 0.0
    %1100 = vmatpush1.xpose.msra.mxu0 0.0
    %1101 = vmatprep.subr.mxu0 0.0
    %1102 = vmatpush1.xpose.msra.mxu0 0.0
    %1103 = vmatprep.subr.mxu0 0.0
    %1104 = vmatpush1.xpose.msra.mxu0 0.0
    %1105 = vmatprep.subr.mxu0 0.0
    %1106 = vmatpush1.xpose.msra.mxu0 0.0
    %1107 = vmatprep.subr.mxu0 0.0
    %1108 = vmatpush1.xpose.msra.mxu0 0.0
    %1109 = vmatprep.subr.mxu0 0.0
    %1110 = vmatpush1.xpose.msra.mxu0 0.0
    %1111 = vmatprep.subr.mxu0 0.0
    %1112 = vmatpush1.xpose.msra.mxu0 0.0
    %1113 = vmatprep.subr.mxu0 0.0
    %1114 = vmatpush1.xpose.msra.mxu0 0.0
    %1115 = vmatprep.subr.mxu0 0.0
    %1116 = vmatpush1.xpose.msra.mxu0 0.0
    %1117 = vmatprep.subr.mxu0 0.0
    %1118 = vmatpush1.xpose.msra.mxu0 0.0
    %1119 = vmatprep.mubr.f32.mxu0 0.0
    %1120 = vmatmul.mubr.f32.gmra.mrb[0].mxu0 %v871
    %v1121 = vpop.f32.mrb[0].mxu0
    %v1122 = vadd.f32 0.0, %v1121
    %v1123 = vpop.f32.mrb[0].mxu0
    %1124 = vdwg.mxu0
    %1125 = vmatprep.subr.mxu0 0.0
    %1126 = vmatpush1.msra.mxu0 %v872
    %1127 = vmatprep.subr.mxu0 0.0
    %1128 = vmatpush1.msra.mxu0 %v873
    %1129 = vmatprep.subr.mxu0 0.0
    %1130 = vmatpush1.msra.mxu0 %v874
    %1131 = vmatprep.subr.mxu0 0.0
    %1132 = vmatpush1.msra.mxu0 %v875
    %1133 = vmatprep.subr.mxu0 0.0
    %1134 = vmatpush1.msra.mxu0 %v876
    %1135 = vmatprep.subr.mxu0 0.0
    %1136 = vmatpush1.msra.mxu0 %v877
    %1137 = vmatprep.subr.mxu0 0.0
    %1138 = vmatpush1.msra.mxu0 %v878
    %1139 = vmatprep.subr.mxu0 0.0
    %1140 = vmatpush1.msra.mxu0 %v879
    %1141 = vmatprep.subr.mxu0 0.0
    %1142 = vmatpush1.msra.mxu0 %v880
    %1143 = vmatprep.subr.mxu0 0.0
    %1144 = vmatpush1.msra.mxu0 %v881
    %1145 = vmatprep.subr.mxu0 0.0
    %1146 = vmatpush1.msra.mxu0 %v882
    %1147 = vmatprep.subr.mxu0 0.0
    %1148 = vmatpush1.msra.mxu0 %v883
    %1149 = vmatprep.subr.mxu0 0.0
    %1150 = vmatpush1.msra.mxu0 %v884
    %1151 = vmatprep.subr.mxu0 0.0
    %1152 = vmatpush1.msra.mxu0 %v885
    %1153 = vmatprep.subr.mxu0 0.0
    %1154 = vmatpush1.msra.mxu0 %v886
    %1155 = vmatprep.subr.mxu0 0.0
    %1156 = vmatpush1.msra.mxu0 %v887
    %1157 = vmatprep.subr.mxu0 0.0
    %1158 = vmatpush1.msra.mxu0 0.0
    %1159 = vmatprep.subr.mxu0 0.0
    %1160 = vmatpush1.msra.mxu0 0.0
    %1161 = vmatprep.subr.mxu0 0.0
    %1162 = vmatpush1.msra.mxu0 0.0
    %1163 = vmatprep.subr.mxu0 0.0
    %1164 = vmatpush1.msra.mxu0 0.0
    %1165 = vmatprep.subr.mxu0 0.0
    %1166 = vmatpush1.msra.mxu0 0.0
    %1167 = vmatprep.subr.mxu0 0.0
    %1168 = vmatpush1.msra.mxu0 0.0
    %1169 = vmatprep.subr.mxu0 0.0
    %1170 = vmatpush1.msra.mxu0 0.0
    %1171 = vmatprep.subr.mxu0 0.0
    %1172 = vmatpush1.msra.mxu0 0.0
    %1173 = vmatprep.subr.mxu0 0.0
    %1174 = vmatpush1.msra.mxu0 0.0
    %1175 = vmatprep.subr.mxu0 0.0
    %1176 = vmatpush1.msra.mxu0 0.0
    %1177 = vmatprep.subr.mxu0 0.0
    %1178 = vmatpush1.msra.mxu0 0.0
    %1179 = vmatprep.subr.mxu0 0.0
    %1180 = vmatpush1.msra.mxu0 0.0
    %1181 = vmatprep.subr.mxu0 0.0
    %1182 = vmatpush1.msra.mxu0 0.0
    %1183 = vmatprep.subr.mxu0 0.0
    %1184 = vmatpush1.msra.mxu0 0.0
    %1185 = vmatprep.subr.mxu0 0.0
    %1186 = vmatpush1.msra.mxu0 0.0
    %1187 = vmatprep.subr.mxu0 0.0
    %1188 = vmatpush1.msra.mxu0 0.0
    %1189 = vmatprep.mubr.f32.mxu0 0.0
    %1190 = vmatmul.mubr.f32.gmra.mrb[0].mxu0 %v1047
    %v1191 = vpop.f32.mrb[0].mxu0
    %v1192 = vadd.f32 0.0, %v1191
    %v1193 = vpop.f32.mrb[0].mxu0
    %1194 = vmatprep.mubr.f32.mxu0 0.0
    %1195 = vmatmul.mubr.f32.gmra.mrb[0].mxu0 %v1052
    %v1196 = vpop.f32.mrb[0].mxu0
    %v1197 = vadd.f32 0.0, %v1196
    %v1198 = vpop.f32.mrb[0].mxu0
    %1199 = vdwg.mxu0
    %1201 = vset.pattern.permute.xlu0 0
    %1202 = vperm.xlu0 %1201, %v1192
    %v1203 = vpop.permute.xlu0 %1202
    %1206 = vset.pattern.permute.xlu0 0
    %1207 = vperm.xlu0 %1206, %v1197
    %v1208 = vpop.permute.xlu0 %1207
    %v1210 = vlaneseq
    %v1211 = vshrl.u32 %v1210, 7
    %v1212 = vsub.s32 0, %v1211
    %v1213 = vrot.slane %v1122, %v1212
    %v1214 = vadd.f32 %v1203, %v1213
    %v1215 = vadd.f32 %v1208, %v1213
    %vm1216 = vcmp.ge.f32.partialorder %v1214, 0.0
    %vm1217 = vcmp.ge.f32.partialorder %v1215, 0.0
    %v1218 = vmul.f32 %v1214, 0.2
    %v1219 = vmul.f32 %v1215, 0.2
    %v1220 = vsel %vm1216, %v1214, %v1218
    %v1221 = vsel %vm1217, %v1215, %v1219
    %v1222 = vsel %vm225, %v1220, -1e+09
    %v1223 = vsel %vm226, %v1221, -1e+09
    %v1224 = vsel %vm602, %v1222, -inf
    %1225 = vmax.xlane.f32.xlu0 %v1224
    %v1226 = vpop.xlane.xlu0 %1225
    %v1227 = vsel %vm602, %v1223, -inf
    %1228 = vmax.xlane.f32.xlu0 %v1227
    %v1229 = vpop.xlane.xlu0 %1228
    %v1230 = vsub.f32 %v1222, %v1226
    %v1231 = vsub.f32 %v1223, %v1229
    %v1232 = vmul.f32 %v1230, 1.442695
    %v1233 = vpow.pop %v1232
    %v1234 = vmul.f32 %v1231, 1.442695
    %v1235 = vpow.pop %v1234
    %v1236 = vsel %vm602, %v1233, 0.0
    %1237 = vadd.xlane.f32.xlu0 %v1236
    %v1238 = vpop.xlane.xlu0 %1237
    %v1239 = vsel %vm602, %v1235, 0.0
    %1240 = vadd.xlane.f32.xlu0 %v1239
    %v1241 = vpop.xlane.xlu0 %1240
    %v1242 = vrcp.pop %v1238
    %v1243 = vrcp.pop %v1241
    %v1244 = vmul.f32 %v1233, %v1242
    %v1245 = vmul.f32 %v1235, %v1243
    %v1247 = vsel %vm602, %v1244, 0
    %v1250 = vsel %vm602, %v1245, 0
    %1252 = vmatprep.subr.mxu0 0.0
    %1253 = vmatpush1.msra.mxu0 %v1047
    %1254 = vmatprep.subr.mxu0 0.0
    %1255 = vmatpush1.msra.mxu0 %v1052
    %1256 = vmatprep.subr.mxu0 0.0
    %1257 = vmatpush1.msra.mxu0 0.0
    %1258 = vmatprep.subr.mxu0 0.0
    %1259 = vmatpush1.msra.mxu0 0.0
    %1260 = vmatprep.subr.mxu0 0.0
    %1261 = vmatpush1.msra.mxu0 0.0
    %1262 = vmatprep.subr.mxu0 0.0
    %1263 = vmatpush1.msra.mxu0 0.0
    %1264 = vmatprep.subr.mxu0 0.0
    %1265 = vmatpush1.msra.mxu0 0.0
    %1266 = vmatprep.subr.mxu0 0.0
    %1267 = vmatpush1.msra.mxu0 0.0
    %1268 = vmatprep.subr.mxu0 0.0
    %1269 = vmatpush1.msra.mxu0 0.0
    %1270 = vmatprep.subr.mxu0 0.0
    %1271 = vmatpush1.msra.mxu0 0.0
    %1272 = vmatprep.subr.mxu0 0.0
    %1273 = vmatpush1.msra.mxu0 0.0
    %1274 = vmatprep.subr.mxu0 0.0
    %1275 = vmatpush1.msra.mxu0 0.0
    %1276 = vmatprep.subr.mxu0 0.0
    %1277 = vmatpush1.msra.mxu0 0.0
    %1278 = vmatprep.subr.mxu0 0.0
    %1279 = vmatpush1.msra.mxu0 0.0
    %1280 = vmatprep.subr.mxu0 0.0
    %1281 = vmatpush1.msra.mxu0 0.0
    %1282 = vmatprep.subr.mxu0 0.0
    %1283 = vmatpush1.msra.mxu0 0.0
    %1284 = vmatprep.subr.mxu0 0.0
    %1285 = vmatpush1.msra.mxu0 0.0
    %1286 = vmatprep.subr.mxu0 0.0
    %1287 = vmatpush1.msra.mxu0 0.0
    %1288 = vmatprep.subr.mxu0 0.0
    %1289 = vmatpush1.msra.mxu0 0.0
    %1290 = vmatprep.subr.mxu0 0.0
    %1291 = vmatpush1.msra.mxu0 0.0
    %1292 = vmatprep.subr.mxu0 0.0
    %1293 = vmatpush1.msra.mxu0 0.0
    %1294 = vmatprep.subr.mxu0 0.0
    %1295 = vmatpush1.msra.mxu0 0.0
    %1296 = vmatprep.subr.mxu0 0.0
    %1297 = vmatpush1.msra.mxu0 0.0
    %1298 = vmatprep.subr.mxu0 0.0
    %1299 = vmatpush1.msra.mxu0 0.0
    %1300 = vmatprep.subr.mxu0 0.0
    %1301 = vmatpush1.msra.mxu0 0.0
    %1302 = vmatprep.subr.mxu0 0.0
    %1303 = vmatpush1.msra.mxu0 0.0
    %1304 = vmatprep.subr.mxu0 0.0
    %1305 = vmatpush1.msra.mxu0 0.0
    %1306 = vmatprep.subr.mxu0 0.0
    %1307 = vmatpush1.msra.mxu0 0.0
    %1308 = vmatprep.subr.mxu0 0.0
    %1309 = vmatpush1.msra.mxu0 0.0
    %1310 = vmatprep.subr.mxu0 0.0
    %1311 = vmatpush1.msra.mxu0 0.0
    %1312 = vmatprep.subr.mxu0 0.0
    %1313 = vmatpush1.msra.mxu0 0.0
    %1314 = vmatprep.subr.mxu0 0.0
    %1315 = vmatpush1.msra.mxu0 0.0
    %1316 = vmatprep.mubr.f32.mxu0 0.0
    %1317 = vmatmul.mubr.f32.gmra.mrb[0].mxu0 %v1247
    %v1318 = vpop.f32.mrb[0].mxu0
    %v1319 = vadd.f32 0.0, %v1318
    %v1320 = vpop.f32.mrb[0].mxu0
    %1321 = vmatprep.mubr.f32.mxu0 0.0
    %1322 = vmatmul.mubr.f32.gmra.mrb[0].mxu0 %v1250
    %v1323 = vpop.f32.mrb[0].mxu0
    %v1324 = vadd.f32 0.0, %v1323
    %v1325 = vpop.f32.mrb[0].mxu0
    %1326 = vdwg.mxu0
    %v1327 = vsel %vm708, %v1319, 0.0
    %v1328 = vsel %vm708, %v1324, 0.0
    %v1329 = vadd.f32 %v1327, 0.0
    %v1330 = vadd.f32 %v1328, 0.0
    %1331 = vset.pattern.permute.xlu0 1
    %1332 = vperm.xlu0 %1331, %v1192
    %v1333 = vpop.permute.xlu0 %1332
    %1335 = vset.pattern.permute.xlu0 1
    %1336 = vperm.xlu0 %1335, %v1197
    %v1337 = vpop.permute.xlu0 %1336
    %v1339 = vlaneseq
    %v1340 = vshrl.u32 %v1339, 7
    %v1341 = vsub.s32 1, %v1340
    %v1342 = vrot.slane %v1122, %v1341
    %v1343 = vadd.f32 %v1333, %v1342
    %v1344 = vadd.f32 %v1337, %v1342
    %vm1345 = vcmp.ge.f32.partialorder %v1343, 0.0
    %vm1346 = vcmp.ge.f32.partialorder %v1344, 0.0
    %v1347 = vmul.f32 %v1343, 0.2
    %v1348 = vmul.f32 %v1344, 0.2
    %v1349 = vsel %vm1345, %v1343, %v1347
    %v1350 = vsel %vm1346, %v1344, %v1348
    %v1351 = vsel %vm225, %v1349, -1e+09
    %v1352 = vsel %vm226, %v1350, -1e+09
    %v1353 = vsel %vm602, %v1351, -inf
    %1354 = vmax.xlane.f32.xlu0 %v1353
    %v1355 = vpop.xlane.xlu0 %1354
    %v1356 = vsel %vm602, %v1352, -inf
    %1357 = vmax.xlane.f32.xlu0 %v1356
    %v1358 = vpop.xlane.xlu0 %1357
    %v1359 = vsub.f32 %v1351, %v1355
    %v1360 = vsub.f32 %v1352, %v1358
    %v1361 = vmul.f32 %v1359, 1.442695
    %v1362 = vpow.pop %v1361
    %v1363 = vmul.f32 %v1360, 1.442695
    %v1364 = vpow.pop %v1363
    %v1365 = vsel %vm602, %v1362, 0.0
    %1366 = vadd.xlane.f32.xlu0 %v1365
    %v1367 = vpop.xlane.xlu0 %1366
    %v1368 = vsel %vm602, %v1364, 0.0
    %1369 = vadd.xlane.f32.xlu0 %v1368
    %v1370 = vpop.xlane.xlu0 %1369
    %v1371 = vrcp.pop %v1367
    %v1372 = vrcp.pop %v1370
    %v1373 = vmul.f32 %v1362, %v1371
    %v1374 = vmul.f32 %v1364, %v1372
    %v1376 = vsel %vm602, %v1373, 0
    %v1379 = vsel %vm602, %v1374, 0
    %1381 = vmatprep.subr.mxu0 0.0
    %1382 = vmatpush1.msra.mxu0 %v1047
    %1383 = vmatprep.subr.mxu0 0.0
    %1384 = vmatpush1.msra.mxu0 %v1052
    %1385 = vmatprep.subr.mxu0 0.0
    %1386 = vmatpush1.msra.mxu0 0.0
    %1387 = vmatprep.subr.mxu0 0.0
    %1388 = vmatpush1.msra.mxu0 0.0
    %1389 = vmatprep.subr.mxu0 0.0
    %1390 = vmatpush1.msra.mxu0 0.0
    %1391 = vmatprep.subr.mxu0 0.0
    %1392 = vmatpush1.msra.mxu0 0.0
    %1393 = vmatprep.subr.mxu0 0.0
    %1394 = vmatpush1.msra.mxu0 0.0
    %1395 = vmatprep.subr.mxu0 0.0
    %1396 = vmatpush1.msra.mxu0 0.0
    %1397 = vmatprep.subr.mxu0 0.0
    %1398 = vmatpush1.msra.mxu0 0.0
    %1399 = vmatprep.subr.mxu0 0.0
    %1400 = vmatpush1.msra.mxu0 0.0
    %1401 = vmatprep.subr.mxu0 0.0
    %1402 = vmatpush1.msra.mxu0 0.0
    %1403 = vmatprep.subr.mxu0 0.0
    %1404 = vmatpush1.msra.mxu0 0.0
    %1405 = vmatprep.subr.mxu0 0.0
    %1406 = vmatpush1.msra.mxu0 0.0
    %1407 = vmatprep.subr.mxu0 0.0
    %1408 = vmatpush1.msra.mxu0 0.0
    %1409 = vmatprep.subr.mxu0 0.0
    %1410 = vmatpush1.msra.mxu0 0.0
    %1411 = vmatprep.subr.mxu0 0.0
    %1412 = vmatpush1.msra.mxu0 0.0
    %1413 = vmatprep.subr.mxu0 0.0
    %1414 = vmatpush1.msra.mxu0 0.0
    %1415 = vmatprep.subr.mxu0 0.0
    %1416 = vmatpush1.msra.mxu0 0.0
    %1417 = vmatprep.subr.mxu0 0.0
    %1418 = vmatpush1.msra.mxu0 0.0
    %1419 = vmatprep.subr.mxu0 0.0
    %1420 = vmatpush1.msra.mxu0 0.0
    %1421 = vmatprep.subr.mxu0 0.0
    %1422 = vmatpush1.msra.mxu0 0.0
    %1423 = vmatprep.subr.mxu0 0.0
    %1424 = vmatpush1.msra.mxu0 0.0
    %1425 = vmatprep.subr.mxu0 0.0
    %1426 = vmatpush1.msra.mxu0 0.0
    %1427 = vmatprep.subr.mxu0 0.0
    %1428 = vmatpush1.msra.mxu0 0.0
    %1429 = vmatprep.subr.mxu0 0.0
    %1430 = vmatpush1.msra.mxu0 0.0
    %1431 = vmatprep.subr.mxu0 0.0
    %1432 = vmatpush1.msra.mxu0 0.0
    %1433 = vmatprep.subr.mxu0 0.0
    %1434 = vmatpush1.msra.mxu0 0.0
    %1435 = vmatprep.subr.mxu0 0.0
    %1436 = vmatpush1.msra.mxu0 0.0
    %1437 = vmatprep.subr.mxu0 0.0
    %1438 = vmatpush1.msra.mxu0 0.0
    %1439 = vmatprep.subr.mxu0 0.0
    %1440 = vmatpush1.msra.mxu0 0.0
    %1441 = vmatprep.subr.mxu0 0.0
    %1442 = vmatpush1.msra.mxu0 0.0
    %1443 = vmatprep.subr.mxu0 0.0
    %1444 = vmatpush1.msra.mxu0 0.0
    %1445 = vmatprep.mubr.f32.mxu0 0.0
    %1446 = vmatmul.mubr.f32.gmra.mrb[0].mxu0 %v1376
    %v1447 = vpop.f32.mrb[0].mxu0
    %v1448 = vadd.f32 0.0, %v1447
    %v1449 = vpop.f32.mrb[0].mxu0
    %1450 = vmatprep.mubr.f32.mxu0 0.0
    %1451 = vmatmul.mubr.f32.gmra.mrb[0].mxu0 %v1379
    %v1452 = vpop.f32.mrb[0].mxu0
    %v1453 = vadd.f32 0.0, %v1452
    %v1454 = vpop.f32.mrb[0].mxu0
    %1455 = vdwg.mxu0
    %v1456 = vsel %vm840, %v1448, 0.0
    %v1457 = vsel %vm840, %v1453, 0.0
    %v1458 = vadd.f32 %v1329, %v1456
    %v1459 = vadd.f32 %v1330, %v1457
    %v1461 = vlaneseq
    %v1462 = vshrl.u32 %v1461, 7
    %v1463 = vsub.s32 0, %v1462
    %v1464 = vrot.slane %v888, %v1463
    %v1466 = vadd.f32 %v1458, %v1464
    %v1467 = vadd.f32 %v1459, %v1464
    %v1468 = vmax.f32 %v1466, 0.0
    %v1469 = vmax.f32 %v1467, 0.0
    %v1470 = vld [vmem:[#allocation17] sm:$0xff]
    %v1471 = vld [vmem:[#allocation17 + $0x8] sm:$0xff]
    %v1472 = vld [vmem:[#allocation17 + $0x10] sm:$0xff]
    %v1473 = vld [vmem:[#allocation17 + $0x18] sm:$0xff]
    %v1474 = vld [vmem:[#allocation17 + $0x20] sm:$0xff]
    %v1475 = vld [vmem:[#allocation17 + $0x28] sm:$0xff]
    %v1476 = vld [vmem:[#allocation17 + $0x30] sm:$0xff]
    %v1477 = vld [vmem:[#allocation17 + $0x38] sm:$0xff]
    %v1478 = vld [vmem:[#allocation17 + $0x40] sm:$0xff]
    %v1479 = vld [vmem:[#allocation17 + $0x48] sm:$0xff]
    %v1480 = vld [vmem:[#allocation17 + $0x50] sm:$0xff]
    %v1481 = vld [vmem:[#allocation17 + $0x58] sm:$0xff]
    %v1482 = vld [vmem:[#allocation17 + $0x60] sm:$0xff]
    %v1483 = vld [vmem:[#allocation17 + $0x68] sm:$0xff]
    %v1484 = vld [vmem:[#allocation17 + $0x70] sm:$0xff]
    %v1485 = vld [vmem:[#allocation17 + $0x78] sm:$0xff]
    %v1486 = vld [vmem:[%s15] sm:$0xff]
    %v1487 = vld [vmem:[#allocation20] sm:$0xff]
    %v1488 = vld [vmem:[#allocation20 + $0x8] sm:$0xff]
    %v1489 = vld [vmem:[#allocation20 + $0x10] sm:$0xff]
    %v1490 = vld [vmem:[#allocation20 + $0x18] sm:$0xff]
    %v1491 = vld [vmem:[#allocation20 + $0x20] sm:$0xff]
    %v1492 = vld [vmem:[#allocation20 + $0x28] sm:$0xff]
    %v1493 = vld [vmem:[#allocation20 + $0x30] sm:$0xff]
    %v1494 = vld [vmem:[#allocation20 + $0x38] sm:$0xff]
    %v1495 = vld [vmem:[#allocation20 + $0x40] sm:$0xff]
    %v1496 = vld [vmem:[#allocation20 + $0x48] sm:$0xff]
    %v1497 = vld [vmem:[#allocation20 + $0x50] sm:$0xff]
    %v1498 = vld [vmem:[#allocation20 + $0x58] sm:$0xff]
    %v1499 = vld [vmem:[#allocation20 + $0x60] sm:$0xff]
    %v1500 = vld [vmem:[#allocation20 + $0x68] sm:$0xff]
    %v1501 = vld [vmem:[#allocation20 + $0x70] sm:$0xff]
    %v1502 = vld [vmem:[#allocation20 + $0x78] sm:$0xff]
    %v1503 = vld [vmem:[%s17] sm:$0x1]
    %v1504 = vld [vmem:[#allocation19] sm:$0xff]
    %v1505 = vld [vmem:[#allocation19 + $0x8] sm:$0xff]
    %v1506 = vld [vmem:[#allocation19 + $0x10] sm:$0xff]
    %v1507 = vld [vmem:[#allocation19 + $0x18] sm:$0xff]
    %v1508 = vld [vmem:[#allocation19 + $0x20] sm:$0xff]
    %v1509 = vld [vmem:[#allocation19 + $0x28] sm:$0xff]
    %v1510 = vld [vmem:[#allocation19 + $0x30] sm:$0xff]
    %v1511 = vld [vmem:[#allocation19 + $0x38] sm:$0xff]
    %v1512 = vld [vmem:[#allocation19 + $0x40] sm:$0xff]
    %v1513 = vld [vmem:[#allocation19 + $0x48] sm:$0xff]
    %v1514 = vld [vmem:[#allocation19 + $0x50] sm:$0xff]
    %v1515 = vld [vmem:[#allocation19 + $0x58] sm:$0xff]
    %v1516 = vld [vmem:[#allocation19 + $0x60] sm:$0xff]
    %v1517 = vld [vmem:[#allocation19 + $0x68] sm:$0xff]
    %v1518 = vld [vmem:[#allocation19 + $0x70] sm:$0xff]
    %v1519 = vld [vmem:[#allocation19 + $0x78] sm:$0xff]
    %1520 = vmatprep.subr.mxu0 0.0
    %1521 = vmatpush1.msra.mxu0 %v1504
    %1522 = vmatprep.subr.mxu0 0.0
    %1523 = vmatpush1.msra.mxu0 %v1505
    %1524 = vmatprep.subr.mxu0 0.0
    %1525 = vmatpush1.msra.mxu0 %v1506
    %1526 = vmatprep.subr.mxu0 0.0
    %1527 = vmatpush1.msra.mxu0 %v1507
    %1528 = vmatprep.subr.mxu0 0.0
    %1529 = vmatpush1.msra.mxu0 %v1508
    %1530 = vmatprep.subr.mxu0 0.0
    %1531 = vmatpush1.msra.mxu0 %v1509
    %1532 = vmatprep.subr.mxu0 0.0
    %1533 = vmatpush1.msra.mxu0 %v1510
    %1534 = vmatprep.subr.mxu0 0.0
    %1535 = vmatpush1.msra.mxu0 %v1511
    %1536 = vmatprep.subr.mxu0 0.0
    %1537 = vmatpush1.msra.mxu0 %v1512
    %1538 = vmatprep.subr.mxu0 0.0
    %1539 = vmatpush1.msra.mxu0 %v1513
    %1540 = vmatprep.subr.mxu0 0.0
    %1541 = vmatpush1.msra.mxu0 %v1514
    %1542 = vmatprep.subr.mxu0 0.0
    %1543 = vmatpush1.msra.mxu0 %v1515
    %1544 = vmatprep.subr.mxu0 0.0
    %1545 = vmatpush1.msra.mxu0 %v1516
    %1546 = vmatprep.subr.mxu0 0.0
    %1547 = vmatpush1.msra.mxu0 %v1517
    %1548 = vmatprep.subr.mxu0 0.0
    %1549 = vmatpush1.msra.mxu0 %v1518
    %1550 = vmatprep.subr.mxu0 0.0
    %1551 = vmatpush1.msra.mxu0 %v1519
    %1552 = vmatprep.subr.mxu0 0.0
    %1553 = vmatpush1.msra.mxu0 0.0
    %1554 = vmatprep.subr.mxu0 0.0
    %1555 = vmatpush1.msra.mxu0 0.0
    %1556 = vmatprep.subr.mxu0 0.0
    %1557 = vmatpush1.msra.mxu0 0.0
    %1558 = vmatprep.subr.mxu0 0.0
    %1559 = vmatpush1.msra.mxu0 0.0
    %1560 = vmatprep.subr.mxu0 0.0
    %1561 = vmatpush1.msra.mxu0 0.0
    %1562 = vmatprep.subr.mxu0 0.0
    %1563 = vmatpush1.msra.mxu0 0.0
    %1564 = vmatprep.subr.mxu0 0.0
    %1565 = vmatpush1.msra.mxu0 0.0
    %1566 = vmatprep.subr.mxu0 0.0
    %1567 = vmatpush1.msra.mxu0 0.0
    %1568 = vmatprep.subr.mxu0 0.0
    %1569 = vmatpush1.msra.mxu0 0.0
    %1570 = vmatprep.subr.mxu0 0.0
    %1571 = vmatpush1.msra.mxu0 0.0
    %1572 = vmatprep.subr.mxu0 0.0
    %1573 = vmatpush1.msra.mxu0 0.0
    %1574 = vmatprep.subr.mxu0 0.0
    %1575 = vmatpush1.msra.mxu0 0.0
    %1576 = vmatprep.subr.mxu0 0.0
    %1577 = vmatpush1.msra.mxu0 0.0
    %1578 = vmatprep.subr.mxu0 0.0
    %1579 = vmatpush1.msra.mxu0 0.0
    %1580 = vmatprep.subr.mxu0 0.0
    %1581 = vmatpush1.msra.mxu0 0.0
    %1582 = vmatprep.subr.mxu0 0.0
    %1583 = vmatpush1.msra.mxu0 0.0
    %1584 = vmatprep.mubr.f32.mxu0 0.0
    %1585 = vmatmul.mubr.f32.gmra.mrb[0].mxu0 %v229
    %v1586 = vpop.f32.mrb[0].mxu0
    %v1587 = vadd.f32 0.0, %v1586
    %v1588 = vpop.f32.mrb[0].mxu0
    %1589 = vmatprep.mubr.f32.mxu0 0.0
    %1590 = vmatmul.mubr.f32.gmra.mrb[0].mxu0 %v230
    %v1591 = vpop.f32.mrb[0].mxu0
    %v1592 = vadd.f32 0.0, %v1591
    %v1593 = vpop.f32.mrb[0].mxu0
    %1594 = vdwg.mxu0
    %1595 = vmatprep.subr.mxu0 0.0
    %1596 = vmatpush1.msra.mxu0 %v1470
    %1597 = vmatprep.subr.mxu0 0.0
    %1598 = vmatpush1.msra.mxu0 %v1471
    %1599 = vmatprep.subr.mxu0 0.0
    %1600 = vmatpush1.msra.mxu0 %v1472
    %1601 = vmatprep.subr.mxu0 0.0
    %1602 = vmatpush1.msra.mxu0 %v1473
    %1603 = vmatprep.subr.mxu0 0.0
    %1604 = vmatpush1.msra.mxu0 %v1474
    %1605 = vmatprep.subr.mxu0 0.0
    %1606 = vmatpush1.msra.mxu0 %v1475
    %1607 = vmatprep.subr.mxu0 0.0
    %1608 = vmatpush1.msra.mxu0 %v1476
    %1609 = vmatprep.subr.mxu0 0.0
    %1610 = vmatpush1.msra.mxu0 %v1477
    %1611 = vmatprep.subr.mxu0 0.0
    %1612 = vmatpush1.msra.mxu0 %v1478
    %1613 = vmatprep.subr.mxu0 0.0
    %1614 = vmatpush1.msra.mxu0 %v1479
    %1615 = vmatprep.subr.mxu0 0.0
    %1616 = vmatpush1.msra.mxu0 %v1480
    %1617 = vmatprep.subr.mxu0 0.0
    %1618 = vmatpush1.msra.mxu0 %v1481
    %1619 = vmatprep.subr.mxu0 0.0
    %1620 = vmatpush1.msra.mxu0 %v1482
    %1621 = vmatprep.subr.mxu0 0.0
    %1622 = vmatpush1.msra.mxu0 %v1483
    %1623 = vmatprep.subr.mxu0 0.0
    %1624 = vmatpush1.msra.mxu0 %v1484
    %1625 = vmatprep.subr.mxu0 0.0
    %1626 = vmatpush1.msra.mxu0 %v1485
    %1627 = vmatprep.subr.mxu0 0.0
    %1628 = vmatpush1.msra.mxu0 0.0
    %1629 = vmatprep.subr.mxu0 0.0
    %1630 = vmatpush1.msra.mxu0 0.0
    %1631 = vmatprep.subr.mxu0 0.0
    %1632 = vmatpush1.msra.mxu0 0.0
    %1633 = vmatprep.subr.mxu0 0.0
    %1634 = vmatpush1.msra.mxu0 0.0
    %1635 = vmatprep.subr.mxu0 0.0
    %1636 = vmatpush1.msra.mxu0 0.0
    %1637 = vmatprep.subr.mxu0 0.0
    %1638 = vmatpush1.msra.mxu0 0.0
    %1639 = vmatprep.subr.mxu0 0.0
    %1640 = vmatpush1.msra.mxu0 0.0
    %1641 = vmatprep.subr.mxu0 0.0
    %1642 = vmatpush1.msra.mxu0 0.0
    %1643 = vmatprep.subr.mxu0 0.0
    %1644 = vmatpush1.msra.mxu0 0.0
    %1645 = vmatprep.subr.mxu0 0.0
    %1646 = vmatpush1.msra.mxu0 0.0
    %1647 = vmatprep.subr.mxu0 0.0
    %1648 = vmatpush1.msra.mxu0 0.0
    %1649 = vmatprep.subr.mxu0 0.0
    %1650 = vmatpush1.msra.mxu0 0.0
    %1651 = vmatprep.subr.mxu0 0.0
    %1652 = vmatpush1.msra.mxu0 0.0
    %1653 = vmatprep.subr.mxu0 0.0
    %1654 = vmatpush1.msra.mxu0 0.0
    %1655 = vmatprep.subr.mxu0 0.0
    %1656 = vmatpush1.msra.mxu0 0.0
    %1657 = vmatprep.subr.mxu0 0.0
    %1658 = vmatpush1.msra.mxu0 0.0
    %1659 = vmatprep.mubr.f32.mxu0 0.0
    %1660 = vmatmul.mubr.f32.gmra.mrb[0].mxu0 %v1468
    %v1661 = vpop.f32.mrb[0].mxu0
    %v1662 = vadd.f32 %v1587, %v1661
    %v1663 = vpop.f32.mrb[0].mxu0
    %1664 = vmatprep.mubr.f32.mxu0 0.0
    %1665 = vmatmul.mubr.f32.gmra.mrb[0].mxu0 %v1469
    %v1666 = vpop.f32.mrb[0].mxu0
    %v1667 = vadd.f32 %v1592, %v1666
    %v1668 = vpop.f32.mrb[0].mxu0
    %1669 = vdwg.mxu0
    %1670 = vmatprep.subr.mxu0 0.0
    %1671 = vmatpush1.xpose.msra.mxu0 %v1662
    %1672 = vmatprep.subr.mxu0 0.0
    %1673 = vmatpush1.xpose.msra.mxu0 %v1667
    %1674 = vmatprep.subr.mxu0 0.0
    %1675 = vmatpush1.xpose.msra.mxu0 0.0
    %1676 = vmatprep.subr.mxu0 0.0
    %1677 = vmatpush1.xpose.msra.mxu0 0.0
    %1678 = vmatprep.subr.mxu0 0.0
    %1679 = vmatpush1.xpose.msra.mxu0 0.0
    %1680 = vmatprep.subr.mxu0 0.0
    %1681 = vmatpush1.xpose.msra.mxu0 0.0
    %1682 = vmatprep.subr.mxu0 0.0
    %1683 = vmatpush1.xpose.msra.mxu0 0.0
    %1684 = vmatprep.subr.mxu0 0.0
    %1685 = vmatpush1.xpose.msra.mxu0 0.0
    %1686 = vmatprep.subr.mxu0 0.0
    %1687 = vmatpush1.xpose.msra.mxu0 0.0
    %1688 = vmatprep.subr.mxu0 0.0
    %1689 = vmatpush1.xpose.msra.mxu0 0.0
    %1690 = vmatprep.subr.mxu0 0.0
    %1691 = vmatpush1.xpose.msra.mxu0 0.0
    %1692 = vmatprep.subr.mxu0 0.0
    %1693 = vmatpush1.xpose.msra.mxu0 0.0
    %1694 = vmatprep.subr.mxu0 0.0
    %1695 = vmatpush1.xpose.msra.mxu0 0.0
    %1696 = vmatprep.subr.mxu0 0.0
    %1697 = vmatpush1.xpose.msra.mxu0 0.0
    %1698 = vmatprep.subr.mxu0 0.0
    %1699 = vmatpush1.xpose.msra.mxu0 0.0
    %1700 = vmatprep.subr.mxu0 0.0
    %1701 = vmatpush1.xpose.msra.mxu0 0.0
    %1702 = vmatprep.subr.mxu0 0.0
    %1703 = vmatpush1.xpose.msra.mxu0 0.0
    %1704 = vmatprep.subr.mxu0 0.0
    %1705 = vmatpush1.xpose.msra.mxu0 0.0
    %1706 = vmatprep.subr.mxu0 0.0
    %1707 = vmatpush1.xpose.msra.mxu0 0.0
    %1708 = vmatprep.subr.mxu0 0.0
    %1709 = vmatpush1.xpose.msra.mxu0 0.0
    %1710 = vmatprep.subr.mxu0 0.0
    %1711 = vmatpush1.xpose.msra.mxu0 0.0
    %1712 = vmatprep.subr.mxu0 0.0
    %1713 = vmatpush1.xpose.msra.mxu0 0.0
    %1714 = vmatprep.subr.mxu0 0.0
    %1715 = vmatpush1.xpose.msra.mxu0 0.0
    %1716 = vmatprep.subr.mxu0 0.0
    %1717 = vmatpush1.xpose.msra.mxu0 0.0
    %1718 = vmatprep.subr.mxu0 0.0
    %1719 = vmatpush1.xpose.msra.mxu0 0.0
    %1720 = vmatprep.subr.mxu0 0.0
    %1721 = vmatpush1.xpose.msra.mxu0 0.0
    %1722 = vmatprep.subr.mxu0 0.0
    %1723 = vmatpush1.xpose.msra.mxu0 0.0
    %1724 = vmatprep.subr.mxu0 0.0
    %1725 = vmatpush1.xpose.msra.mxu0 0.0
    %1726 = vmatprep.subr.mxu0 0.0
    %1727 = vmatpush1.xpose.msra.mxu0 0.0
    %1728 = vmatprep.subr.mxu0 0.0
    %1729 = vmatpush1.xpose.msra.mxu0 0.0
    %1730 = vmatprep.subr.mxu0 0.0
    %1731 = vmatpush1.xpose.msra.mxu0 0.0
    %1732 = vmatprep.subr.mxu0 0.0
    %1733 = vmatpush1.xpose.msra.mxu0 0.0
    %1734 = vmatprep.mubr.f32.mxu0 0.0
    %1735 = vmatmul.mubr.f32.gmra.mrb[0].mxu0 %v1486
    %v1736 = vpop.f32.mrb[0].mxu0
    %v1737 = vadd.f32 0.0, %v1736
    %v1738 = vpop.f32.mrb[0].mxu0
    %1739 = vdwg.mxu0
    %1740 = vmatprep.subr.mxu0 0.0
    %1741 = vmatpush1.msra.mxu0 %v1487
    %1742 = vmatprep.subr.mxu0 0.0
    %1743 = vmatpush1.msra.mxu0 %v1488
    %1744 = vmatprep.subr.mxu0 0.0
    %1745 = vmatpush1.msra.mxu0 %v1489
    %1746 = vmatprep.subr.mxu0 0.0
    %1747 = vmatpush1.msra.mxu0 %v1490
    %1748 = vmatprep.subr.mxu0 0.0
    %1749 = vmatpush1.msra.mxu0 %v1491
    %1750 = vmatprep.subr.mxu0 0.0
    %1751 = vmatpush1.msra.mxu0 %v1492
    %1752 = vmatprep.subr.mxu0 0.0
    %1753 = vmatpush1.msra.mxu0 %v1493
    %1754 = vmatprep.subr.mxu0 0.0
    %1755 = vmatpush1.msra.mxu0 %v1494
    %1756 = vmatprep.subr.mxu0 0.0
    %1757 = vmatpush1.msra.mxu0 %v1495
    %1758 = vmatprep.subr.mxu0 0.0
    %1759 = vmatpush1.msra.mxu0 %v1496
    %1760 = vmatprep.subr.mxu0 0.0
    %1761 = vmatpush1.msra.mxu0 %v1497
    %1762 = vmatprep.subr.mxu0 0.0
    %1763 = vmatpush1.msra.mxu0 %v1498
    %1764 = vmatprep.subr.mxu0 0.0
    %1765 = vmatpush1.msra.mxu0 %v1499
    %1766 = vmatprep.subr.mxu0 0.0
    %1767 = vmatpush1.msra.mxu0 %v1500
    %1768 = vmatprep.subr.mxu0 0.0
    %1769 = vmatpush1.msra.mxu0 %v1501
    %1770 = vmatprep.subr.mxu0 0.0
    %1771 = vmatpush1.msra.mxu0 %v1502
    %1772 = vmatprep.subr.mxu0 0.0
    %1773 = vmatpush1.msra.mxu0 0.0
    %1774 = vmatprep.subr.mxu0 0.0
    %1775 = vmatpush1.msra.mxu0 0.0
    %1776 = vmatprep.subr.mxu0 0.0
    %1777 = vmatpush1.msra.mxu0 0.0
    %1778 = vmatprep.subr.mxu0 0.0
    %1779 = vmatpush1.msra.mxu0 0.0
    %1780 = vmatprep.subr.mxu0 0.0
    %1781 = vmatpush1.msra.mxu0 0.0
    %1782 = vmatprep.subr.mxu0 0.0
    %1783 = vmatpush1.msra.mxu0 0.0
    %1784 = vmatprep.subr.mxu0 0.0
    %1785 = vmatpush1.msra.mxu0 0.0
    %1786 = vmatprep.subr.mxu0 0.0
    %1787 = vmatpush1.msra.mxu0 0.0
    %1788 = vmatprep.subr.mxu0 0.0
    %1789 = vmatpush1.msra.mxu0 0.0
    %1790 = vmatprep.subr.mxu0 0.0
    %1791 = vmatpush1.msra.mxu0 0.0
    %1792 = vmatprep.subr.mxu0 0.0
    %1793 = vmatpush1.msra.mxu0 0.0
    %1794 = vmatprep.subr.mxu0 0.0
    %1795 = vmatpush1.msra.mxu0 0.0
    %1796 = vmatprep.subr.mxu0 0.0
    %1797 = vmatpush1.msra.mxu0 0.0
    %1798 = vmatprep.subr.mxu0 0.0
    %1799 = vmatpush1.msra.mxu0 0.0
    %1800 = vmatprep.subr.mxu0 0.0
    %1801 = vmatpush1.msra.mxu0 0.0
    %1802 = vmatprep.subr.mxu0 0.0
    %1803 = vmatpush1.msra.mxu0 0.0
    %1804 = vmatprep.mubr.f32.mxu0 0.0
    %1805 = vmatmul.mubr.f32.gmra.mrb[0].mxu0 %v1662
    %v1806 = vpop.f32.mrb[0].mxu0
    %v1807 = vadd.f32 0.0, %v1806
    %v1808 = vpop.f32.mrb[0].mxu0
    %1809 = vmatprep.mubr.f32.mxu0 0.0
    %1810 = vmatmul.mubr.f32.gmra.mrb[0].mxu0 %v1667
    %v1811 = vpop.f32.mrb[0].mxu0
    %v1812 = vadd.f32 0.0, %v1811
    %v1813 = vpop.f32.mrb[0].mxu0
    %1814 = vdwg.mxu0
    %1816 = vset.pattern.permute.xlu0 0
    %1817 = vperm.xlu0 %1816, %v1807
    %v1818 = vpop.permute.xlu0 %1817
    %1821 = vset.pattern.permute.xlu0 0
    %1822 = vperm.xlu0 %1821, %v1812
    %v1823 = vpop.permute.xlu0 %1822
    %v1825 = vlaneseq
    %v1826 = vshrl.u32 %v1825, 7
    %v1827 = vsub.s32 0, %v1826
    %v1828 = vrot.slane %v1737, %v1827
    %v1829 = vadd.f32 %v1818, %v1828
    %v1830 = vadd.f32 %v1823, %v1828
    %vm1831 = vcmp.ge.f32.partialorder %v1829, 0.0
    %vm1832 = vcmp.ge.f32.partialorder %v1830, 0.0
    %v1833 = vmul.f32 %v1829, 0.2
    %v1834 = vmul.f32 %v1830, 0.2
    %v1835 = vsel %vm1831, %v1829, %v1833
    %v1836 = vsel %vm1832, %v1830, %v1834
    %v1837 = vsel %vm225, %v1835, -1e+09
    %v1838 = vsel %vm226, %v1836, -1e+09
    %v1839 = vsel %vm602, %v1837, -inf
    %1840 = vmax.xlane.f32.xlu0 %v1839
    %v1841 = vpop.xlane.xlu0 %1840
    %v1842 = vsel %vm602, %v1838, -inf
    %1843 = vmax.xlane.f32.xlu0 %v1842
    %v1844 = vpop.xlane.xlu0 %1843
    %v1845 = vsub.f32 %v1837, %v1841
    %v1846 = vsub.f32 %v1838, %v1844
    %v1847 = vmul.f32 %v1845, 1.442695
    %v1848 = vpow.pop %v1847
    %v1849 = vmul.f32 %v1846, 1.442695
    %v1850 = vpow.pop %v1849
    %v1851 = vsel %vm602, %v1848, 0.0
    %1852 = vadd.xlane.f32.xlu0 %v1851
    %v1853 = vpop.xlane.xlu0 %1852
    %v1854 = vsel %vm602, %v1850, 0.0
    %1855 = vadd.xlane.f32.xlu0 %v1854
    %v1856 = vpop.xlane.xlu0 %1855
    %v1857 = vrcp.pop %v1853
    %v1858 = vrcp.pop %v1856
    %v1859 = vmul.f32 %v1848, %v1857
    %v1860 = vmul.f32 %v1850, %v1858
    %v1862 = vsel %vm602, %v1859, 0
    %v1865 = vsel %vm602, %v1860, 0
    %1867 = vmatprep.subr.mxu0 0.0
    %1868 = vmatpush1.msra.mxu0 %v1662
    %1869 = vmatprep.subr.mxu0 0.0
    %1870 = vmatpush1.msra.mxu0 %v1667
    %1871 = vmatprep.subr.mxu0 0.0
    %1872 = vmatpush1.msra.mxu0 0.0
    %1873 = vmatprep.subr.mxu0 0.0
    %1874 = vmatpush1.msra.mxu0 0.0
    %1875 = vmatprep.subr.mxu0 0.0
    %1876 = vmatpush1.msra.mxu0 0.0
    %1877 = vmatprep.subr.mxu0 0.0
    %1878 = vmatpush1.msra.mxu0 0.0
    %1879 = vmatprep.subr.mxu0 0.0
    %1880 = vmatpush1.msra.mxu0 0.0
    %1881 = vmatprep.subr.mxu0 0.0
    %1882 = vmatpush1.msra.mxu0 0.0
    %1883 = vmatprep.subr.mxu0 0.0
    %1884 = vmatpush1.msra.mxu0 0.0
    %1885 = vmatprep.subr.mxu0 0.0
    %1886 = vmatpush1.msra.mxu0 0.0
    %1887 = vmatprep.subr.mxu0 0.0
    %1888 = vmatpush1.msra.mxu0 0.0
    %1889 = vmatprep.subr.mxu0 0.0
    %1890 = vmatpush1.msra.mxu0 0.0
    %1891 = vmatprep.subr.mxu0 0.0
    %1892 = vmatpush1.msra.mxu0 0.0
    %1893 = vmatprep.subr.mxu0 0.0
    %1894 = vmatpush1.msra.mxu0 0.0
    %1895 = vmatprep.subr.mxu0 0.0
    %1896 = vmatpush1.msra.mxu0 0.0
    %1897 = vmatprep.subr.mxu0 0.0
    %1898 = vmatpush1.msra.mxu0 0.0
    %1899 = vmatprep.subr.mxu0 0.0
    %1900 = vmatpush1.msra.mxu0 0.0
    %1901 = vmatprep.subr.mxu0 0.0
    %1902 = vmatpush1.msra.mxu0 0.0
    %1903 = vmatprep.subr.mxu0 0.0
    %1904 = vmatpush1.msra.mxu0 0.0
    %1905 = vmatprep.subr.mxu0 0.0
    %1906 = vmatpush1.msra.mxu0 0.0
    %1907 = vmatprep.subr.mxu0 0.0
    %1908 = vmatpush1.msra.mxu0 0.0
    %1909 = vmatprep.subr.mxu0 0.0
    %1910 = vmatpush1.msra.mxu0 0.0
    %1911 = vmatprep.subr.mxu0 0.0
    %1912 = vmatpush1.msra.mxu0 0.0
    %1913 = vmatprep.subr.mxu0 0.0
    %1914 = vmatpush1.msra.mxu0 0.0
    %1915 = vmatprep.subr.mxu0 0.0
    %1916 = vmatpush1.msra.mxu0 0.0
    %1917 = vmatprep.subr.mxu0 0.0
    %1918 = vmatpush1.msra.mxu0 0.0
    %1919 = vmatprep.subr.mxu0 0.0
    %1920 = vmatpush1.msra.mxu0 0.0
    %1921 = vmatprep.subr.mxu0 0.0
    %1922 = vmatpush1.msra.mxu0 0.0
    %1923 = vmatprep.subr.mxu0 0.0
    %1924 = vmatpush1.msra.mxu0 0.0
    %1925 = vmatprep.subr.mxu0 0.0
    %1926 = vmatpush1.msra.mxu0 0.0
    %1927 = vmatprep.subr.mxu0 0.0
    %1928 = vmatpush1.msra.mxu0 0.0
    %1929 = vmatprep.subr.mxu0 0.0
    %1930 = vmatpush1.msra.mxu0 0.0
    %1931 = vmatprep.mubr.f32.mxu0 0.0
    %1932 = vmatmul.mubr.f32.gmra.mrb[0].mxu0 %v1862
    %v1933 = vpop.f32.mrb[0].mxu0
    %v1934 = vadd.f32 0.0, %v1933
    %v1935 = vpop.f32.mrb[0].mxu0
    %1936 = vmatprep.mubr.f32.mxu0 0.0
    %1937 = vmatmul.mubr.f32.gmra.mrb[0].mxu0 %v1865
    %v1938 = vpop.f32.mrb[0].mxu0
    %v1939 = vadd.f32 0.0, %v1938
    %v1940 = vpop.f32.mrb[0].mxu0
    %1941 = vdwg.mxu0
    %vm1942 = vcmp.lt.s32.totalorder %v232, 12
    %vm1943 = vmand %vm706, %vm1942
    %v1944 = vsel %vm1943, %v1934, 0.0
    %v1945 = vsel %vm1943, %v1939, 0.0
    %v1946 = vadd.f32 %v1944, 0.0
    %v1947 = vadd.f32 %v1945, 0.0
    %v1949 = vlaneseq
    %v1950 = vshrl.u32 %v1949, 7
    %v1951 = vsub.s32 0, %v1950
    %v1952 = vrot.slane %v1503, %v1951
    %v1954 = vadd.f32 %v1946, %v1952
    %v1955 = vadd.f32 %v1947, %v1952
    %1956 = vst [vmem:[#allocation22] sm:$0xff] %v1954
    %1957 = vst [vmem:[#allocation22 + $0x8] sm:$0xff] %v1955
    // Predicated region
    $region122: #{_gatdec_forward.1} parent=1 // pred_check
      _
    $region123: #{_gatdec_forward.1} parent=1 // pred_check_branch
      %1959 = sbr.rel (0) target = $region125
    $region124: #{_gatdec_forward.1} parent=1 // pred_region
      %s1961 = ssub.s32 256, 256
      %1962 = vsyncadd [#allocation4], %s1961
      %s1963 = sshll.u32 [#allocation22], 4
      %s1964 = int_to_ptr.vmem [resolvable:$true] %s1963
      %1969 = dma.vmem_to_hbm [thread:$0]  %s1964, 256, %s18, [#allocation4], 128, 128, 8
    $region125: #{_gatdec_forward.1} parent=1 // pred_fallthru
      _
    // Predicated region
    $region126: #{_gatdec_forward.1} parent=1 // pred_check
      _
    $region127: #{_gatdec_forward.1} parent=1 // pred_check_branch
      %1971 = sbr.rel (0) target = $region129
    $region128: #{_gatdec_forward.1} parent=1 // pred_region
      %1972 = dma.done [#allocation4], 256
    $region129: #{_gatdec_forward.1} parent=1 // pred_fallthru
      _
    %1973 = vsyncpa [#allocation3], 1
    %1974 = vsyncpa [#allocation6], 1
    %1975 = vsyncpa [#allocation9], 1
    %1976 = vsyncpa [#allocation12], 1
    %1977 = vsyncpa [#allocation15], 1
    %1978 = vsyncpa [#allocation18], 1
    %1979 = vsyncpa [#allocation21], 1
    %1980 = vsyncpa [#allocation4], 1

</llo_original>
